<compile_context>
chip_gen: v5e
topology: v5e:2x2
jax: 0.10.0
libtpu: 0.0.40
codegen_flags: <defaults>
</compile_context>

<pallas_src>
import jax
import jax.numpy as jnp
from jax.experimental import pallas as pl
from jax.experimental.pallas import tpu as pltpu

# --- model geometry -----------------------------------------------------------
D_IN = 784                   # 28*28; divisible by 8, used unpadded
D_H, D_H_P = 300, 384        # hidden padded to 3 * 128 lanes
D_OUT, D_OUT_P = 10, 128     # logits padded to 1 * 128 lanes


def _mlp_kernel(x_ref, w1_ref, b1_ref, w2_ref, b2_ref,
                w3_ref, b3_ref, w4_ref, b4_ref, o_ref):
    # x tile arrives as raw f32 straight from HBM; cast to bf16 on the VPU
    # (idle slots) instead of a separate wrapper-side pad/cast pass.
    x = x_ref[...].astype(jnp.bfloat16)

    h = jnp.dot(x, w1_ref[...], preferred_element_type=jnp.float32) + b1_ref[...]
    h = jnp.maximum(h, 0.0)                           # relu(fc1); dropout == id (eval)

    h = jnp.dot(h.astype(jnp.bfloat16), w2_ref[...],
                preferred_element_type=jnp.float32) + b2_ref[...]
    h = jnp.maximum(h, 0.0)                           # relu(fc2); dropout == id (eval)

    h = jnp.dot(h.astype(jnp.bfloat16), w3_ref[...],
                preferred_element_type=jnp.float32) + b3_ref[...]
    h = jnp.maximum(h, 0.0)                           # relu(fc3)

    o_ref[...] = (jnp.dot(h.astype(jnp.bfloat16), w4_ref[...],
                          preferred_element_type=jnp.float32)
                  + b4_ref[...]).astype(o_ref.dtype)  # fc4 logits (padded to 128)


def _pad2(a, rows, cols, dtype):
    """Zero-pad a 2D array to (rows, cols) and cast."""
    r, c = a.shape
    return jnp.pad(a, ((0, rows - r), (0, cols - c))).astype(dtype)


def _pad_params(params):
    """Pad (in,out) weights to lane-aligned shapes (bf16) and biases (f32)."""
    return dict(
        w1=_pad2(params["w1"], D_IN, D_H_P, jnp.bfloat16),
        b1=_pad2(params["b1"], 1, D_H_P, jnp.float32),
        w2=_pad2(params["w2"], D_H_P, D_H_P, jnp.bfloat16),
        b2=_pad2(params["b2"], 1, D_H_P, jnp.float32),
        w3=_pad2(params["w3"], D_H_P, D_H_P, jnp.bfloat16),
        b3=_pad2(params["b3"], 1, D_H_P, jnp.float32),
        w4=_pad2(params["w4"], D_H_P, D_OUT_P, jnp.bfloat16),
        b4=_pad2(params["b4"], 1, D_OUT_P, jnp.float32),
    )


def _pick_tm(B):
    """Batch tile selection.

    Small batch: right-sized block (round_up(B, 8)) instead of padding to 128.
    Large batch: biggest of {512, 256, 128} that still yields >= 2 grid steps
    so the "parallel" batch axis can be sharded across v7x's two TensorCores.
    """
    if B <= 128:
        return max(8, ((B + 7) // 8) * 8)
    for tm in (512, 256, 128):
        if pl.cdiv(B, tm) >= 2:
            return tm
    return 128


def _vmem_limit_bytes(tm):
    """Size the scoped VMEM limit from the actual tile math (with headroom)."""
    w = 2 * 2 * (D_IN * D_H_P + 2 * D_H_P * D_H_P + D_H_P * D_OUT_P)  # bf16, 2 bufs
    b = 2 * 4 * (3 * D_H_P + D_OUT_P)                                 # f32 biases
    x = 2 * 4 * tm * D_IN                                             # f32 x tile, 2 bufs
    o = 2 * 4 * tm * D_OUT_P                                          # f32 out tile, 2 bufs
    act = 3 * 4 * tm * D_H_P                                          # f32 activation scratch
    need = w + b + x + o + act
    return max(16 * 1024 * 1024, 2 * need)


def mnist_mlp_forward(x_nchw, params):
    """x_nchw: (B, 1, 28, 28) float32.  params: dict of unpadded (in,out) f32 weights/biases."""
    B = x_nchw.shape[0]
    x = x_nchw.reshape(B, D_IN).astype(jnp.float32)   # == x.view(-1, 784); bf16 cast happens in-kernel

    tm = _pick_tm(B)
    b_pad = pl.cdiv(B, tm) * tm
    if b_pad != B:
        x = jnp.pad(x, ((0, b_pad - B), (0, 0)))      # batch pad only; feature dim stays 784

    p = _pad_params(params)
    w1, b1, w2, b2 = p["w1"], p["b1"], p["w2"], p["b2"]
    w3, b3, w4, b4 = p["w3"], p["b3"], p["w4"], p["b4"]

    resident = lambda shape: pl.BlockSpec(shape, lambda i: (0, 0))  # weights stay VMEM-resident

    out = pl.pallas_call(
        _mlp_kernel,
        out_shape=jax.ShapeDtypeStruct((b_pad, D_OUT_P), jnp.float32),
        grid=(b_pad // tm,),
        in_specs=[
            pl.BlockSpec((tm, D_IN), lambda i: (i, 0)),
            resident(w1.shape), resident(b1.shape),
            resident(w2.shape), resident(b2.shape),
            resident(w3.shape), resident(b3.shape),
            resident(w4.shape), resident(b4.shape),
        ],
        out_specs=pl.BlockSpec((tm, D_OUT_P), lambda i: (i, 0)),
        compiler_params=pltpu.CompilerParams(
            dimension_semantics=("parallel",),        # split batch tiles across TCs on v7x
            vmem_limit_bytes=_vmem_limit_bytes(tm),
        ),
    )(x, w1, b1, w2, b2, w3, b3, w4, b4)

    return out[:B, :D_OUT]                            # slice padded logits back to (B, 10)


def init_params(key):
    """Deterministic PyTorch-default-style init: U(-1/sqrt(fan_in), 1/sqrt(fan_in)).
    Weights stored as (in_features, out_features), f32, unpadded."""
    dims = [(D_IN, D_H), (D_H, D_H), (D_H, D_H), (D_H, D_OUT)]
    params = {}
    for idx, (fan_in, fan_out) in enumerate(dims, start=1):
        key, kw, kb = jax.random.split(key, 3)
        bound = 1.0 / (fan_in ** 0.5)
        params[f"w{idx}"] = jax.random.uniform(
            kw, (fan_in, fan_out), jnp.float32, minval=-bound, maxval=bound)
        params[f"b{idx}"] = jax.random.uniform(
            kb, (1, fan_out), jnp.float32, minval=-bound, maxval=bound)
    return params


if __name__ == "__main__":
    key = jax.random.PRNGKey(0)
    kp, kx_small, kx_big = jax.random.split(key, 3)

    params = init_params(kp)

    # plain-JAX reference using the same bf16 operands + f32 accumulation
    # (eval-mode forward); zero-padding of hidden/output dims is numerically exact.
    def ref_forward(x_nchw):
        def lin(h, w, b):
            return jnp.dot(h.astype(jnp.bfloat16), w.astype(jnp.bfloat16),
                           preferred_element_type=jnp.float32) + b
        h = x_nchw.reshape(-1, D_IN)
        h = jnp.maximum(lin(h, params["w1"], params["b1"]), 0.0)
        h = jnp.maximum(lin(h, params["w2"], params["b2"]), 0.0)
        h = jnp.maximum(lin(h, params["w3"], params["b3"]), 0.0)
        return lin(h, params["w4"], params["b4"])

    # exercise both paths: small-batch (TM=8, grid=1) and tiled (TM=128, grid=2)
    for B, kx in ((8, kx_small), (160, kx_big)):
        x = jax.random.normal(kx, (B, 1, 28, 28), jnp.float32)

        logits = mnist_mlp_forward(x, params)
        jax.block_until_ready(logits)

        assert logits.shape == (B, D_OUT), logits.shape
        assert bool(jnp.all(jnp.isfinite(logits)))

        ref = ref_forward(x)
        assert bool(jnp.allclose(logits, ref, atol=1e-2, rtol=1e-2)), \
            float(jnp.max(jnp.abs(logits - ref)))

    print("KERNEL_OK")
</pallas_src>

<mosaic_0001>
module attributes {stable_mosaic.version = 11 : i64} {
  func.func @_mlp_kernel(%arg0: i32, %arg1: memref<8x784xf32, #tpu.memory_space<vmem>>, %arg2: memref<784x384xbf16, #tpu.memory_space<vmem>>, %arg3: memref<1x384xf32, #tpu.memory_space<vmem>>, %arg4: memref<384x384xbf16, #tpu.memory_space<vmem>>, %arg5: memref<1x384xf32, #tpu.memory_space<vmem>>, %arg6: memref<384x384xbf16, #tpu.memory_space<vmem>>, %arg7: memref<1x384xf32, #tpu.memory_space<vmem>>, %arg8: memref<384x128xbf16, #tpu.memory_space<vmem>>, %arg9: memref<1x128xf32, #tpu.memory_space<vmem>>, %arg10: memref<8x128xf32, #tpu.memory_space<vmem>>) attributes {dimension_semantics = [#tpu.dimension_semantics<parallel>], iteration_bounds = array<i64: 1>, scalar_prefetch = 0 : i64, scratch_operands = 0 : i64, tpu.core_type = #tpu.core_type<tc>, window_params = [{transform_indices = @transform_0, window_bounds = array<i64: 8, 784>}, {pipeline_mode = #tpu.pipeline_mode<synchronous>, transform_indices = @transform_1, window_bounds = array<i64: 784, 384>}, {pipeline_mode = #tpu.pipeline_mode<synchronous>, transform_indices = @transform_2, window_bounds = array<i64: 1, 384>}, {pipeline_mode = #tpu.pipeline_mode<synchronous>, transform_indices = @transform_3, window_bounds = array<i64: 384, 384>}, {pipeline_mode = #tpu.pipeline_mode<synchronous>, transform_indices = @transform_4, window_bounds = array<i64: 1, 384>}, {pipeline_mode = #tpu.pipeline_mode<synchronous>, transform_indices = @transform_5, window_bounds = array<i64: 384, 384>}, {pipeline_mode = #tpu.pipeline_mode<synchronous>, transform_indices = @transform_6, window_bounds = array<i64: 1, 384>}, {pipeline_mode = #tpu.pipeline_mode<synchronous>, transform_indices = @transform_7, window_bounds = array<i64: 384, 128>}, {pipeline_mode = #tpu.pipeline_mode<synchronous>, transform_indices = @transform_8, window_bounds = array<i64: 1, 128>}, {transform_indices = @transform_9, window_bounds = array<i64: 8, 128>}]} {
    %c0 = arith.constant 0 : index
    %c0_0 = arith.constant 0 : index
    %0 = vector.load %arg1[%c0, %c0_0] : memref<8x784xf32, #tpu.memory_space<vmem>>, vector<8x784xf32>
    %1 = arith.truncf %0 : vector<8x784xf32> to vector<8x784xbf16>
    %c0_1 = arith.constant 0 : index
    %c0_2 = arith.constant 0 : index
    %2 = vector.load %arg2[%c0_1, %c0_2] : memref<784x384xbf16, #tpu.memory_space<vmem>>, vector<784x384xbf16>
    %cst = arith.constant dense<0.000000e+00> : vector<8x384xf32>
    %3 = tpu.matmul %1, %2, %cst {dimension_numbers = #tpu.dot_dimension_numbers<[1], [0], [0], [1], [0, 0, 1, 1], [], []>} : vector<8x784xbf16>, vector<784x384xbf16>, vector<8x384xf32> -> vector<8x384xf32>
    %c0_3 = arith.constant 0 : index
    %c0_4 = arith.constant 0 : index
    %4 = vector.load %arg3[%c0_3, %c0_4] : memref<1x384xf32, #tpu.memory_space<vmem>>, vector<1x384xf32>
    %5 = vector.broadcast %4 : vector<1x384xf32> to vector<8x384xf32>
    %6 = arith.addf %3, %5 : vector<8x384xf32>
    %cst_5 = arith.constant 0.000000e+00 : f32
    %7 = vector.broadcast %cst_5 : f32 to vector<8x384xf32>
    %8 = arith.maximumf %6, %7 : vector<8x384xf32>
    %9 = arith.truncf %8 : vector<8x384xf32> to vector<8x384xbf16>
    %c0_6 = arith.constant 0 : index
    %c0_7 = arith.constant 0 : index
    %10 = vector.load %arg4[%c0_6, %c0_7] : memref<384x384xbf16, #tpu.memory_space<vmem>>, vector<384x384xbf16>
    %cst_8 = arith.constant dense<0.000000e+00> : vector<8x384xf32>
    %11 = tpu.matmul %9, %10, %cst_8 {dimension_numbers = #tpu.dot_dimension_numbers<[1], [0], [0], [1], [0, 0, 1, 1], [], []>} : vector<8x384xbf16>, vector<384x384xbf16>, vector<8x384xf32> -> vector<8x384xf32>
    %c0_9 = arith.constant 0 : index
    %c0_10 = arith.constant 0 : index
    %12 = vector.load %arg5[%c0_9, %c0_10] : memref<1x384xf32, #tpu.memory_space<vmem>>, vector<1x384xf32>
    %13 = vector.broadcast %12 : vector<1x384xf32> to vector<8x384xf32>
    %14 = arith.addf %11, %13 : vector<8x384xf32>
    %cst_11 = arith.constant 0.000000e+00 : f32
    %15 = vector.broadcast %cst_11 : f32 to vector<8x384xf32>
    %16 = arith.maximumf %14, %15 : vector<8x384xf32>
    %17 = arith.truncf %16 : vector<8x384xf32> to vector<8x384xbf16>
    %c0_12 = arith.constant 0 : index
    %c0_13 = arith.constant 0 : index
    %18 = vector.load %arg6[%c0_12, %c0_13] : memref<384x384xbf16, #tpu.memory_space<vmem>>, vector<384x384xbf16>
    %cst_14 = arith.constant dense<0.000000e+00> : vector<8x384xf32>
    %19 = tpu.matmul %17, %18, %cst_14 {dimension_numbers = #tpu.dot_dimension_numbers<[1], [0], [0], [1], [0, 0, 1, 1], [], []>} : vector<8x384xbf16>, vector<384x384xbf16>, vector<8x384xf32> -> vector<8x384xf32>
    %c0_15 = arith.constant 0 : index
    %c0_16 = arith.constant 0 : index
    %20 = vector.load %arg7[%c0_15, %c0_16] : memref<1x384xf32, #tpu.memory_space<vmem>>, vector<1x384xf32>
    %21 = vector.broadcast %20 : vector<1x384xf32> to vector<8x384xf32>
    %22 = arith.addf %19, %21 : vector<8x384xf32>
    %cst_17 = arith.constant 0.000000e+00 : f32
    %23 = vector.broadcast %cst_17 : f32 to vector<8x384xf32>
    %24 = arith.maximumf %22, %23 : vector<8x384xf32>
    %25 = arith.truncf %24 : vector<8x384xf32> to vector<8x384xbf16>
    %c0_18 = arith.constant 0 : index
    %c0_19 = arith.constant 0 : index
    %26 = vector.load %arg8[%c0_18, %c0_19] : memref<384x128xbf16, #tpu.memory_space<vmem>>, vector<384x128xbf16>
    %cst_20 = arith.constant dense<0.000000e+00> : vector<8x128xf32>
    %27 = tpu.matmul %25, %26, %cst_20 {dimension_numbers = #tpu.dot_dimension_numbers<[1], [0], [0], [1], [0, 0, 1, 1], [], []>} : vector<8x384xbf16>, vector<384x128xbf16>, vector<8x128xf32> -> vector<8x128xf32>
    %c0_21 = arith.constant 0 : index
    %c0_22 = arith.constant 0 : index
    %28 = vector.load %arg9[%c0_21, %c0_22] : memref<1x128xf32, #tpu.memory_space<vmem>>, vector<1x128xf32>
    %29 = vector.broadcast %28 : vector<1x128xf32> to vector<8x128xf32>
    %30 = arith.addf %27, %29 : vector<8x128xf32>
    %c0_23 = arith.constant 0 : index
    %c0_24 = arith.constant 0 : index
    %31 = vector.load %arg10[%c0_23, %c0_24] : memref<8x128xf32, #tpu.memory_space<vmem>>, vector<8x128xf32>
    tpu.vector_store %arg10[%c0_23, %c0_24], %30 {strides = array<i32>} : memref<8x128xf32, #tpu.memory_space<vmem>>, vector<8x128xf32>,
    return
  }
  func.func @transform_0(%arg0: i32) -> (i32, i32) {
    %c0_i32 = arith.constant 0 : i32
    %c0_i32_0 = arith.constant 0 : i32
    return %arg0, %c0_i32 : i32, i32
  }
  func.func @transform_1(%arg0: i32) -> (i32, i32) {
    %c0_i32 = arith.constant 0 : i32
    %c0_i32_0 = arith.constant 0 : i32
    %c0_i32_1 = arith.constant 0 : i32
    return %c0_i32, %c0_i32_0 : i32, i32
  }
  func.func @transform_2(%arg0: i32) -> (i32, i32) {
    %c0_i32 = arith.constant 0 : i32
    %c0_i32_0 = arith.constant 0 : i32
    %c0_i32_1 = arith.constant 0 : i32
    return %c0_i32, %c0_i32_0 : i32, i32
  }
  func.func @transform_3(%arg0: i32) -> (i32, i32) {
    %c0_i32 = arith.constant 0 : i32
    %c0_i32_0 = arith.constant 0 : i32
    %c0_i32_1 = arith.constant 0 : i32
    return %c0_i32, %c0_i32_0 : i32, i32
  }
  func.func @transform_4(%arg0: i32) -> (i32, i32) {
    %c0_i32 = arith.constant 0 : i32
    %c0_i32_0 = arith.constant 0 : i32
    %c0_i32_1 = arith.constant 0 : i32
    return %c0_i32, %c0_i32_0 : i32, i32
  }
  func.func @transform_5(%arg0: i32) -> (i32, i32) {
    %c0_i32 = arith.constant 0 : i32
    %c0_i32_0 = arith.constant 0 : i32
    %c0_i32_1 = arith.constant 0 : i32
    return %c0_i32, %c0_i32_0 : i32, i32
  }
  func.func @transform_6(%arg0: i32) -> (i32, i32) {
    %c0_i32 = arith.constant 0 : i32
    %c0_i32_0 = arith.constant 0 : i32
    %c0_i32_1 = arith.constant 0 : i32
    return %c0_i32, %c0_i32_0 : i32, i32
  }
  func.func @transform_7(%arg0: i32) -> (i32, i32) {
    %c0_i32 = arith.constant 0 : i32
    %c0_i32_0 = arith.constant 0 : i32
    %c0_i32_1 = arith.constant 0 : i32
    return %c0_i32, %c0_i32_0 : i32, i32
  }
  func.func @transform_8(%arg0: i32) -> (i32, i32) {
    %c0_i32 = arith.constant 0 : i32
    %c0_i32_0 = arith.constant 0 : i32
    %c0_i32_1 = arith.constant 0 : i32
    return %c0_i32, %c0_i32_0 : i32, i32
  }
  func.func @transform_9(%arg0: i32) -> (i32, i32) {
    %c0_i32 = arith.constant 0 : i32
    %c0_i32_0 = arith.constant 0 : i32
    return %arg0, %c0_i32 : i32, i32
  }
}

</mosaic_0001>

<llo_original>
// kernel: tpu_custom_call.1
$region0: #{tpu_custom_call.1}
  #allocation0 [shape = 'u32[]', space=smem, size = 0x4, offset = 0x4, fixed_abs, tag = 'smem constant byte address 0x4 - core index']
  #allocation1 [shape = 'u32[72,128]{1,0:T(1,128)}', space=vmem, size = 0x9000, scoped, tag = 'internal scratch']
  %s0 = inlined_call_operand.hbm [shape: f32[8,784], index: 0, kind: input, shape index: {}]
  %s1 = inlined_call_operand.hbm [shape: bf16[784,384], index: 1, kind: input, shape index: {}]
  %s2 = inlined_call_operand.hbm [shape: f32[1,384], index: 2, kind: input, shape index: {}]
  %s3 = inlined_call_operand.hbm [shape: bf16[384,384], index: 3, kind: input, shape index: {}]
  %s4 = inlined_call_operand.vmem [shape: f32[1,384], index: 4, kind: input, shape index: {}]
  %s5 = inlined_call_operand.hbm [shape: bf16[384,384], index: 5, kind: input, shape index: {}]
  %s6 = inlined_call_operand.hbm [shape: f32[1,384], index: 6, kind: input, shape index: {}]
  %s7 = inlined_call_operand.hbm [shape: bf16[384,128], index: 7, kind: input, shape index: {}]
  %s8 = inlined_call_operand.vmem [shape: f32[1,128], index: 8, kind: input, shape index: {}]
  %s9 = inlined_call_operand.hbm [shape: f32[8,128], index: 9, kind: output, shape index: {}]
  %s10 = sld [smem:[#allocation0]]
  $region74: #{tpu_custom_call.1} parent=0
    _
  %s12 = ssub.s32 1, %s10
  %s13 = scalar_select 0, %s12, %s10
  $region1: #{tpu_custom_call.1} parent=0
    #allocation2 [shape = 'u8[28672]{0}', space=vmem, size = 0x7000, scoped, tag = 'input window, operand 0, single buffered']
    #allocation3 [shape = 's32[1]{0}', space=sflag, size = 0x4, scoped, tag = 'scoped memory for tpu_custom_call.1']
    #allocation4 [shape = 's32[1]{0}', space=sflag, size = 0x4, scoped, tag = 'scoped memory for tpu_custom_call.1']
    #allocation5 [shape = 'u8[602112]{0}', space=vmem, size = 0x93000, scoped, tag = 'input window, operand 1, single buffered']
    #allocation6 [shape = 's32[1]{0}', space=sflag, size = 0x4, scoped, tag = 'scoped memory for tpu_custom_call.1']
    #allocation7 [shape = 'u8[1536]{0}', space=vmem, size = 0x800, scoped, tag = 'input window, operand 2, single buffered']
    #allocation8 [shape = 'u8[294912]{0}', space=vmem, size = 0x48000, scoped, tag = 'input window, operand 3, single buffered']
    #allocation9 [shape = 's32[1]{0}', space=sflag, size = 0x4, scoped, tag = 'scoped memory for tpu_custom_call.1']
    #allocation10 [shape = 'u8[294912]{0}', space=vmem, size = 0x48000, scoped, tag = 'input window, operand 5, single buffered']
    #allocation11 [shape = 'u8[1536]{0}', space=vmem, size = 0x800, scoped, tag = 'input window, operand 6, single buffered']
    #allocation12 [shape = 's32[1]{0}', space=sflag, size = 0x4, scoped, tag = 'scoped memory for tpu_custom_call.1']
    #allocation13 [shape = 'u8[98304]{0}', space=vmem, size = 0x18000, scoped, tag = 'input window, operand 7, single buffered']
    #allocation14 [shape = 'u8[4096]{0}', space=vmem, size = 0x1000, scoped, tag = 'output window, operand 0, single buffered']
    %14 = vsyncpa [#allocation3], 0
    %15 = vsyncpa [#allocation6], 0
    %16 = vsyncpa [#allocation9], 0
    %17 = vsyncpa [#allocation12], 0
    %18 = vsyncpa [#allocation4], 0
    // Predicated region
    $region2: #{tpu_custom_call.1} parent=1 // pred_check
      _
    $region3: #{tpu_custom_call.1} parent=1 // pred_check_branch
      %20 = sbr.rel (0) target = $region5
    $region4: #{tpu_custom_call.1} parent=1 // pred_region
      %22 = vsyncadd [#allocation3], 0
      %s24 = sshll.u32 %s0, 4
      %s25 = int_to_ptr.hbm [resolvable:$true] %s24
      %s26 = sshll.u32 [#allocation2], 4
      %s27 = int_to_ptr.vmem [resolvable:$true] %s26
      %29 = dma.hbm_to_vmem [thread:$0]  %s25, 896, %s27, [#allocation3]
    $region5: #{tpu_custom_call.1} parent=1 // pred_fallthru
      _
    // Predicated region
    $region6: #{tpu_custom_call.1} parent=1 // pred_check
      _
    $region7: #{tpu_custom_call.1} parent=1 // pred_check_branch
      %31 = sbr.rel (0) target = $region9
    $region8: #{tpu_custom_call.1} parent=1 // pred_region
      %33 = vsyncadd [#allocation6], 0
      %s34 = sshll.u32 %s1, 4
      %s35 = int_to_ptr.hbm [resolvable:$true] %s34
      %s36 = sshll.u32 [#allocation5], 4
      %s37 = int_to_ptr.vmem [resolvable:$true] %s36
      %42 = dma.hbm_to_vmem [thread:$0]  %s35, 18816, %s37, [#allocation6], 192, 192, 12
    $region9: #{tpu_custom_call.1} parent=1 // pred_fallthru
      _
    // Predicated region
    $region10: #{tpu_custom_call.1} parent=1 // pred_check
      _
    $region11: #{tpu_custom_call.1} parent=1 // pred_check_branch
      %44 = sbr.rel (0) target = $region13
    $region12: #{tpu_custom_call.1} parent=1 // pred_region
      %46 = vsyncadd [#allocation6], 0
      %s48 = sshll.u32 %s2, 4
      %s49 = int_to_ptr.hbm [resolvable:$true] %s48
      %s50 = sshll.u32 [#allocation7], 4
      %s51 = int_to_ptr.vmem [resolvable:$true] %s50
      %53 = dma.hbm_to_vmem [thread:$0]  %s49, 48, %s51, [#allocation6]
    $region13: #{tpu_custom_call.1} parent=1 // pred_fallthru
      _
    // Predicated region
    $region14: #{tpu_custom_call.1} parent=1 // pred_check
      _
    $region15: #{tpu_custom_call.1} parent=1 // pred_check_branch
      %55 = sbr.rel (0) target = $region17
    $region16: #{tpu_custom_call.1} parent=1 // pred_region
      %57 = vsyncadd [#allocation9], 0
      %s58 = sshll.u32 %s3, 4
      %s59 = int_to_ptr.hbm [resolvable:$true] %s58
      %s60 = sshll.u32 [#allocation8], 4
      %s61 = int_to_ptr.vmem [resolvable:$true] %s60
      %66 = dma.hbm_to_vmem [thread:$0]  %s59, 9216, %s61, [#allocation9], 192, 192, 12
    $region17: #{tpu_custom_call.1} parent=1 // pred_fallthru
      _
    // Predicated region
    $region18: #{tpu_custom_call.1} parent=1 // pred_check
      _
    $region19: #{tpu_custom_call.1} parent=1 // pred_check_branch
      %68 = sbr.rel (0) target = $region21
    $region20: #{tpu_custom_call.1} parent=1 // pred_region
      _
    $region21: #{tpu_custom_call.1} parent=1 // pred_fallthru
      _
    // Predicated region
    $region22: #{tpu_custom_call.1} parent=1 // pred_check
      _
    $region23: #{tpu_custom_call.1} parent=1 // pred_check_branch
      %70 = sbr.rel (0) target = $region25
    $region24: #{tpu_custom_call.1} parent=1 // pred_region
      %72 = vsyncadd [#allocation9], 0
      %s73 = sshll.u32 %s5, 4
      %s74 = int_to_ptr.hbm [resolvable:$true] %s73
      %s75 = sshll.u32 [#allocation10], 4
      %s76 = int_to_ptr.vmem [resolvable:$true] %s75
      %81 = dma.hbm_to_vmem [thread:$0]  %s74, 9216, %s76, [#allocation9], 192, 192, 12
    $region25: #{tpu_custom_call.1} parent=1 // pred_fallthru
      _
    // Predicated region
    $region26: #{tpu_custom_call.1} parent=1 // pred_check
      _
    $region27: #{tpu_custom_call.1} parent=1 // pred_check_branch
      %83 = sbr.rel (0) target = $region29
    $region28: #{tpu_custom_call.1} parent=1 // pred_region
      %85 = vsyncadd [#allocation12], 0
      %s87 = sshll.u32 %s6, 4
      %s88 = int_to_ptr.hbm [resolvable:$true] %s87
      %s89 = sshll.u32 [#allocation11], 4
      %s90 = int_to_ptr.vmem [resolvable:$true] %s89
      %92 = dma.hbm_to_vmem [thread:$0]  %s88, 48, %s90, [#allocation12]
    $region29: #{tpu_custom_call.1} parent=1 // pred_fallthru
      _
    // Predicated region
    $region30: #{tpu_custom_call.1} parent=1 // pred_check
      _
    $region31: #{tpu_custom_call.1} parent=1 // pred_check_branch
      %94 = sbr.rel (0) target = $region33
    $region32: #{tpu_custom_call.1} parent=1 // pred_region
      %96 = vsyncadd [#allocation12], 0
      %s97 = sshll.u32 %s7, 4
      %s98 = int_to_ptr.hbm [resolvable:$true] %s97
      %s99 = sshll.u32 [#allocation13], 4
      %s100 = int_to_ptr.vmem [resolvable:$true] %s99
      %105 = dma.hbm_to_vmem [thread:$0]  %s98, 3072, %s100, [#allocation12], 64, 64, 4
    $region33: #{tpu_custom_call.1} parent=1 // pred_fallthru
      _
    // Predicated region
    $region34: #{tpu_custom_call.1} parent=1 // pred_check
      _
    $region35: #{tpu_custom_call.1} parent=1 // pred_check_branch
      %107 = sbr.rel (0) target = $region37
    $region36: #{tpu_custom_call.1} parent=1 // pred_region
      _
    $region37: #{tpu_custom_call.1} parent=1 // pred_fallthru
      _
    // Predicated region
    $region38: #{tpu_custom_call.1} parent=1 // pred_check
      _
    $region39: #{tpu_custom_call.1} parent=1 // pred_check_branch
      %109 = sbr.rel (0) target = $region41
    $region40: #{tpu_custom_call.1} parent=1 // pred_region
      %111 = dma.done [#allocation3], 896
    $region41: #{tpu_custom_call.1} parent=1 // pred_fallthru
      _
    // Predicated region
    $region42: #{tpu_custom_call.1} parent=1 // pred_check
      _
    $region43: #{tpu_custom_call.1} parent=1 // pred_check_branch
      %113 = sbr.rel (0) target = $region45
    $region44: #{tpu_custom_call.1} parent=1 // pred_region
      %115 = dma.done [#allocation6], 18816
    $region45: #{tpu_custom_call.1} parent=1 // pred_fallthru
      _
    // Predicated region
    $region46: #{tpu_custom_call.1} parent=1 // pred_check
      _
    $region47: #{tpu_custom_call.1} parent=1 // pred_check_branch
      %117 = sbr.rel (0) target = $region49
    $region48: #{tpu_custom_call.1} parent=1 // pred_region
      %119 = dma.done [#allocation6], 48
    $region49: #{tpu_custom_call.1} parent=1 // pred_fallthru
      _
    // Predicated region
    $region50: #{tpu_custom_call.1} parent=1 // pred_check
      _
    $region51: #{tpu_custom_call.1} parent=1 // pred_check_branch
      %121 = sbr.rel (0) target = $region53
    $region52: #{tpu_custom_call.1} parent=1 // pred_region
      %123 = dma.done [#allocation9], 9216
    $region53: #{tpu_custom_call.1} parent=1 // pred_fallthru
      _
    // Predicated region
    $region54: #{tpu_custom_call.1} parent=1 // pred_check
      _
    $region55: #{tpu_custom_call.1} parent=1 // pred_check_branch
      %125 = sbr.rel (0) target = $region57
    $region56: #{tpu_custom_call.1} parent=1 // pred_region
      %127 = dma.done [#allocation9], 9216
    $region57: #{tpu_custom_call.1} parent=1 // pred_fallthru
      _
    // Predicated region
    $region58: #{tpu_custom_call.1} parent=1 // pred_check
      _
    $region59: #{tpu_custom_call.1} parent=1 // pred_check_branch
      %129 = sbr.rel (0) target = $region61
    $region60: #{tpu_custom_call.1} parent=1 // pred_region
      %131 = dma.done [#allocation12], 48
    $region61: #{tpu_custom_call.1} parent=1 // pred_fallthru
      _
    // Predicated region
    $region62: #{tpu_custom_call.1} parent=1 // pred_check
      _
    $region63: #{tpu_custom_call.1} parent=1 // pred_check_branch
      %133 = sbr.rel (0) target = $region65
    $region64: #{tpu_custom_call.1} parent=1 // pred_region
      %135 = dma.done [#allocation12], 3072
    $region65: #{tpu_custom_call.1} parent=1 // pred_fallthru
      _
    %v137 = vld [vmem:[#allocation2] sm:$0xff]
    %v138 = vld [vmem:[#allocation2 + $0x8] sm:$0xff]
    %v139 = vld [vmem:[#allocation2 + $0x10] sm:$0xff]
    %v140 = vld [vmem:[#allocation2 + $0x18] sm:$0xff]
    %v141 = vld [vmem:[#allocation2 + $0x20] sm:$0xff]
    %v142 = vld [vmem:[#allocation2 + $0x28] sm:$0xff]
    %v143 = vld [vmem:[#allocation2 + $0x30] sm:$0xff]
    %v144 = vpack.c.bf16 %v137, %v137
    %v145 = vpack.c.bf16 %v138, %v138
    %v146 = vpack.c.bf16 %v139, %v139
    %v147 = vpack.c.bf16 %v140, %v140
    %v148 = vpack.c.bf16 %v141, %v141
    %v149 = vpack.c.bf16 %v142, %v142
    %v150 = vpack.c.bf16 %v143, %v143
    %v151 = vld [vmem:[#allocation5] sm:$0xff]
    %v152 = vld [vmem:[#allocation5 + $0x8] sm:$0xf]
    %v153 = vld [vmem:[#allocation5 + $0xc] sm:$0xff]
    %v154 = vld [vmem:[#allocation5 + $0x14] sm:$0xf]
    %v155 = vld [vmem:[#allocation5 + $0x18] sm:$0xff]
    %v156 = vld [vmem:[#allocation5 + $0x20] sm:$0xf]
    %v157 = vld [vmem:[#allocation5 + $0x24] sm:$0xff]
    %v158 = vld [vmem:[#allocation5 + $0x2c] sm:$0xf]
    %v159 = vld [vmem:[#allocation5 + $0x30] sm:$0xff]
    %v160 = vld [vmem:[#allocation5 + $0x38] sm:$0xf]
    %v161 = vld [vmem:[#allocation5 + $0x3c] sm:$0xff]
    %v162 = vld [vmem:[#allocation5 + $0x44] sm:$0xf]
    %v163 = vld [vmem:[#allocation5 + $0x48] sm:$0xff]
    %v164 = vld [vmem:[#allocation5 + $0x50] sm:$0xf]
    %v165 = vld [vmem:[#allocation5 + $0x54] sm:$0xff]
    %v166 = vld [vmem:[#allocation5 + $0x5c] sm:$0xf]
    %v167 = vld [vmem:[#allocation5 + $0x60] sm:$0xff]
    %v168 = vld [vmem:[#allocation5 + $0x68] sm:$0xf]
    %v169 = vld [vmem:[#allocation5 + $0x6c] sm:$0xff]
    %v170 = vld [vmem:[#allocation5 + $0x74] sm:$0xf]
    %v171 = vld [vmem:[#allocation5 + $0x78] sm:$0xff]
    %v172 = vld [vmem:[#allocation5 + $0x80] sm:$0xf]
    %v173 = vld [vmem:[#allocation5 + $0x84] sm:$0xff]
    %v174 = vld [vmem:[#allocation5 + $0x8c] sm:$0xf]
    %v175 = vld [vmem:[#allocation5 + $0x90] sm:$0xff]
    %v176 = vld [vmem:[#allocation5 + $0x98] sm:$0xf]
    %v177 = vld [vmem:[#allocation5 + $0x9c] sm:$0xff]
    %v178 = vld [vmem:[#allocation5 + $0xa4] sm:$0xf]
    %v179 = vld [vmem:[#allocation5 + $0xa8] sm:$0xff]
    %v180 = vld [vmem:[#allocation5 + $0xb0] sm:$0xf]
    %v181 = vld [vmem:[#allocation5 + $0xb4] sm:$0xff]
    %v182 = vld [vmem:[#allocation5 + $0xbc] sm:$0xf]
    %v183 = vld [vmem:[#allocation5 + $0xc0] sm:$0xff]
    %v184 = vld [vmem:[#allocation5 + $0xc8] sm:$0xf]
    %v185 = vld [vmem:[#allocation5 + $0xcc] sm:$0xff]
    %v186 = vld [vmem:[#allocation5 + $0xd4] sm:$0xf]
    %v187 = vld [vmem:[#allocation5 + $0xd8] sm:$0xff]
    %v188 = vld [vmem:[#allocation5 + $0xe0] sm:$0xf]
    %v189 = vld [vmem:[#allocation5 + $0xe4] sm:$0xff]
    %v190 = vld [vmem:[#allocation5 + $0xec] sm:$0xf]
    %v191 = vld [vmem:[#allocation5 + $0xf0] sm:$0xff]
    %v192 = vld [vmem:[#allocation5 + $0xf8] sm:$0xf]
    %v193 = vld [vmem:[#allocation5 + $0xfc] sm:$0xff]
    %v194 = vld [vmem:[#allocation5 + $0x104] sm:$0xf]
    %v195 = vld [vmem:[#allocation5 + $0x108] sm:$0xff]
    %v196 = vld [vmem:[#allocation5 + $0x110] sm:$0xf]
    %v197 = vld [vmem:[#allocation5 + $0x114] sm:$0xff]
    %v198 = vld [vmem:[#allocation5 + $0x11c] sm:$0xf]
    %v199 = vld [vmem:[#allocation5 + $0x120] sm:$0xff]
    %v200 = vld [vmem:[#allocation5 + $0x128] sm:$0xf]
    %v201 = vld [vmem:[#allocation5 + $0x12c] sm:$0xff]
    %v202 = vld [vmem:[#allocation5 + $0x134] sm:$0xf]
    %v203 = vld [vmem:[#allocation5 + $0x138] sm:$0xff]
    %v204 = vld [vmem:[#allocation5 + $0x140] sm:$0xf]
    %v205 = vld [vmem:[#allocation5 + $0x144] sm:$0xff]
    %v206 = vld [vmem:[#allocation5 + $0x14c] sm:$0xf]
    %v207 = vld [vmem:[#allocation5 + $0x150] sm:$0xff]
    %v208 = vld [vmem:[#allocation5 + $0x158] sm:$0xf]
    %v209 = vld [vmem:[#allocation5 + $0x15c] sm:$0xff]
    %v210 = vld [vmem:[#allocation5 + $0x164] sm:$0xf]
    %v211 = vld [vmem:[#allocation5 + $0x168] sm:$0xff]
    %v212 = vld [vmem:[#allocation5 + $0x170] sm:$0xf]
    %v213 = vld [vmem:[#allocation5 + $0x174] sm:$0xff]
    %v214 = vld [vmem:[#allocation5 + $0x17c] sm:$0xf]
    %v215 = vld [vmem:[#allocation5 + $0x180] sm:$0xff]
    %v216 = vld [vmem:[#allocation5 + $0x188] sm:$0xf]
    %v217 = vld [vmem:[#allocation5 + $0x18c] sm:$0xff]
    %v218 = vld [vmem:[#allocation5 + $0x194] sm:$0xf]
    %v219 = vld [vmem:[#allocation5 + $0x198] sm:$0xff]
    %v220 = vld [vmem:[#allocation5 + $0x1a0] sm:$0xf]
    %v221 = vld [vmem:[#allocation5 + $0x1a4] sm:$0xff]
    %v222 = vld [vmem:[#allocation5 + $0x1ac] sm:$0xf]
    %v223 = vld [vmem:[#allocation5 + $0x1b0] sm:$0xff]
    %v224 = vld [vmem:[#allocation5 + $0x1b8] sm:$0xf]
    %v225 = vld [vmem:[#allocation5 + $0x1bc] sm:$0xff]
    %v226 = vld [vmem:[#allocation5 + $0x1c4] sm:$0xf]
    %v227 = vld [vmem:[#allocation5 + $0x1c8] sm:$0xff]
    %v228 = vld [vmem:[#allocation5 + $0x1d0] sm:$0xf]
    %v229 = vld [vmem:[#allocation5 + $0x1d4] sm:$0xff]
    %v230 = vld [vmem:[#allocation5 + $0x1dc] sm:$0xf]
    %v231 = vld [vmem:[#allocation5 + $0x1e0] sm:$0xff]
    %v232 = vld [vmem:[#allocation5 + $0x1e8] sm:$0xf]
    %v233 = vld [vmem:[#allocation5 + $0x1ec] sm:$0xff]
    %v234 = vld [vmem:[#allocation5 + $0x1f4] sm:$0xf]
    %v235 = vld [vmem:[#allocation5 + $0x1f8] sm:$0xff]
    %v236 = vld [vmem:[#allocation5 + $0x200] sm:$0xf]
    %v237 = vld [vmem:[#allocation5 + $0x204] sm:$0xff]
    %v238 = vld [vmem:[#allocation5 + $0x20c] sm:$0xf]
    %v239 = vld [vmem:[#allocation5 + $0x210] sm:$0xff]
    %v240 = vld [vmem:[#allocation5 + $0x218] sm:$0xf]
    %v241 = vld [vmem:[#allocation5 + $0x21c] sm:$0xff]
    %v242 = vld [vmem:[#allocation5 + $0x224] sm:$0xf]
    %v243 = vld [vmem:[#allocation5 + $0x228] sm:$0xff]
    %v244 = vld [vmem:[#allocation5 + $0x230] sm:$0xf]
    %v245 = vld [vmem:[#allocation5 + $0x234] sm:$0xff]
    %v246 = vld [vmem:[#allocation5 + $0x23c] sm:$0xf]
    %v247 = vld [vmem:[#allocation5 + $0x240] sm:$0xff]
    %v248 = vld [vmem:[#allocation5 + $0x248] sm:$0xf]
    %v249 = vld [vmem:[#allocation5 + $0x24c] sm:$0xff]
    %v250 = vld [vmem:[#allocation5 + $0x254] sm:$0xf]
    %v251 = vld [vmem:[#allocation5 + $0x258] sm:$0xff]
    %v252 = vld [vmem:[#allocation5 + $0x260] sm:$0xf]
    %v253 = vld [vmem:[#allocation5 + $0x264] sm:$0xff]
    %v254 = vld [vmem:[#allocation5 + $0x26c] sm:$0xf]
    %v255 = vld [vmem:[#allocation5 + $0x270] sm:$0xff]
    %v256 = vld [vmem:[#allocation5 + $0x278] sm:$0xf]
    %v257 = vld [vmem:[#allocation5 + $0x27c] sm:$0xff]
    %v258 = vld [vmem:[#allocation5 + $0x284] sm:$0xf]
    %v259 = vld [vmem:[#allocation5 + $0x288] sm:$0xff]
    %v260 = vld [vmem:[#allocation5 + $0x290] sm:$0xf]
    %v261 = vld [vmem:[#allocation5 + $0x294] sm:$0xff]
    %v262 = vld [vmem:[#allocation5 + $0x29c] sm:$0xf]
    %v263 = vld [vmem:[#allocation5 + $0x2a0] sm:$0xff]
    %v264 = vld [vmem:[#allocation5 + $0x2a8] sm:$0xf]
    %v265 = vld [vmem:[#allocation5 + $0x2ac] sm:$0xff]
    %v266 = vld [vmem:[#allocation5 + $0x2b4] sm:$0xf]
    %v267 = vld [vmem:[#allocation5 + $0x2b8] sm:$0xff]
    %v268 = vld [vmem:[#allocation5 + $0x2c0] sm:$0xf]
    %v269 = vld [vmem:[#allocation5 + $0x2c4] sm:$0xff]
    %v270 = vld [vmem:[#allocation5 + $0x2cc] sm:$0xf]
    %v271 = vld [vmem:[#allocation5 + $0x2d0] sm:$0xff]
    %v272 = vld [vmem:[#allocation5 + $0x2d8] sm:$0xf]
    %v273 = vld [vmem:[#allocation5 + $0x2dc] sm:$0xff]
    %v274 = vld [vmem:[#allocation5 + $0x2e4] sm:$0xf]
    %v275 = vld [vmem:[#allocation5 + $0x2e8] sm:$0xff]
    %v276 = vld [vmem:[#allocation5 + $0x2f0] sm:$0xf]
    %v277 = vld [vmem:[#allocation5 + $0x2f4] sm:$0xff]
    %v278 = vld [vmem:[#allocation5 + $0x2fc] sm:$0xf]
    %v279 = vld [vmem:[#allocation5 + $0x300] sm:$0xff]
    %v280 = vld [vmem:[#allocation5 + $0x308] sm:$0xf]
    %v281 = vld [vmem:[#allocation5 + $0x30c] sm:$0xff]
    %v282 = vld [vmem:[#allocation5 + $0x314] sm:$0xf]
    %v283 = vld [vmem:[#allocation5 + $0x318] sm:$0xff]
    %v284 = vld [vmem:[#allocation5 + $0x320] sm:$0xf]
    %v285 = vld [vmem:[#allocation5 + $0x324] sm:$0xff]
    %v286 = vld [vmem:[#allocation5 + $0x32c] sm:$0xf]
    %v287 = vld [vmem:[#allocation5 + $0x330] sm:$0xff]
    %v288 = vld [vmem:[#allocation5 + $0x338] sm:$0xf]
    %v289 = vld [vmem:[#allocation5 + $0x33c] sm:$0xff]
    %v290 = vld [vmem:[#allocation5 + $0x344] sm:$0xf]
    %v291 = vld [vmem:[#allocation5 + $0x348] sm:$0xff]
    %v292 = vld [vmem:[#allocation5 + $0x350] sm:$0xf]
    %v293 = vld [vmem:[#allocation5 + $0x354] sm:$0xff]
    %v294 = vld [vmem:[#allocation5 + $0x35c] sm:$0xf]
    %v295 = vld [vmem:[#allocation5 + $0x360] sm:$0xff]
    %v296 = vld [vmem:[#allocation5 + $0x368] sm:$0xf]
    %v297 = vld [vmem:[#allocation5 + $0x36c] sm:$0xff]
    %v298 = vld [vmem:[#allocation5 + $0x374] sm:$0xf]
    %v299 = vld [vmem:[#allocation5 + $0x378] sm:$0xff]
    %v300 = vld [vmem:[#allocation5 + $0x380] sm:$0xf]
    %v301 = vld [vmem:[#allocation5 + $0x384] sm:$0xff]
    %v302 = vld [vmem:[#allocation5 + $0x38c] sm:$0xf]
    %v303 = vld [vmem:[#allocation5 + $0x390] sm:$0xff]
    %v304 = vld [vmem:[#allocation5 + $0x398] sm:$0xf]
    %v305 = vld [vmem:[#allocation5 + $0x39c] sm:$0xff]
    %v306 = vld [vmem:[#allocation5 + $0x3a4] sm:$0xf]
    %v307 = vld [vmem:[#allocation5 + $0x3a8] sm:$0xff]
    %v308 = vld [vmem:[#allocation5 + $0x3b0] sm:$0xf]
    %v309 = vld [vmem:[#allocation5 + $0x3b4] sm:$0xff]
    %v310 = vld [vmem:[#allocation5 + $0x3bc] sm:$0xf]
    %v311 = vld [vmem:[#allocation5 + $0x3c0] sm:$0xff]
    %v312 = vld [vmem:[#allocation5 + $0x3c8] sm:$0xf]
    %v313 = vld [vmem:[#allocation5 + $0x3cc] sm:$0xff]
    %v314 = vld [vmem:[#allocation5 + $0x3d4] sm:$0xf]
    %v315 = vld [vmem:[#allocation5 + $0x3d8] sm:$0xff]
    %v316 = vld [vmem:[#allocation5 + $0x3e0] sm:$0xf]
    %v317 = vld [vmem:[#allocation5 + $0x3e4] sm:$0xff]
    %v318 = vld [vmem:[#allocation5 + $0x3ec] sm:$0xf]
    %v319 = vld [vmem:[#allocation5 + $0x3f0] sm:$0xff]
    %v320 = vld [vmem:[#allocation5 + $0x3f8] sm:$0xf]
    %v321 = vld [vmem:[#allocation5 + $0x3fc] sm:$0xff]
    %v322 = vld [vmem:[#allocation5 + $0x404] sm:$0xf]
    %v323 = vld [vmem:[#allocation5 + $0x408] sm:$0xff]
    %v324 = vld [vmem:[#allocation5 + $0x410] sm:$0xf]
    %v325 = vld [vmem:[#allocation5 + $0x414] sm:$0xff]
    %v326 = vld [vmem:[#allocation5 + $0x41c] sm:$0xf]
    %v327 = vld [vmem:[#allocation5 + $0x420] sm:$0xff]
    %v328 = vld [vmem:[#allocation5 + $0x428] sm:$0xf]
    %v329 = vld [vmem:[#allocation5 + $0x42c] sm:$0xff]
    %v330 = vld [vmem:[#allocation5 + $0x434] sm:$0xf]
    %v331 = vld [vmem:[#allocation5 + $0x438] sm:$0xff]
    %v332 = vld [vmem:[#allocation5 + $0x440] sm:$0xf]
    %v333 = vld [vmem:[#allocation5 + $0x444] sm:$0xff]
    %v334 = vld [vmem:[#allocation5 + $0x44c] sm:$0xf]
    %v335 = vld [vmem:[#allocation5 + $0x450] sm:$0xff]
    %v336 = vld [vmem:[#allocation5 + $0x458] sm:$0xf]
    %v337 = vld [vmem:[#allocation5 + $0x45c] sm:$0xff]
    %v338 = vld [vmem:[#allocation5 + $0x464] sm:$0xf]
    %v339 = vld [vmem:[#allocation5 + $0x468] sm:$0xff]
    %v340 = vld [vmem:[#allocation5 + $0x470] sm:$0xf]
    %v341 = vld [vmem:[#allocation5 + $0x474] sm:$0xff]
    %v342 = vld [vmem:[#allocation5 + $0x47c] sm:$0xf]
    %v343 = vld [vmem:[#allocation5 + $0x480] sm:$0xff]
    %v344 = vld [vmem:[#allocation5 + $0x488] sm:$0xf]
    %v345 = vld [vmem:[#allocation5 + $0x48c] sm:$0xff]
    %v346 = vld [vmem:[#allocation5 + $0x494] sm:$0xf]
    %v347 = vld [vmem:[#allocation7] sm:$0x7]
    %v349 = vperm.slane %v347, 0
    %v350 = vperm.slane %v347, 1
    %v351 = vperm.slane %v347, 2
    %v551 = vunpack.c.l.b16 %v151
    %v552 = vunpack.c.h.b16 %v151
    %v553 = vunpack.c.l.b16 %v152
    %v554 = vunpack.c.l.b16 %v153
    %v555 = vunpack.c.h.b16 %v153
    %v556 = vunpack.c.l.b16 %v154
    %v557 = vunpack.c.l.b16 %v155
    %v558 = vunpack.c.h.b16 %v155
    %v559 = vunpack.c.l.b16 %v156
    %v560 = vunpack.c.l.b16 %v157
    %v561 = vunpack.c.h.b16 %v157
    %v562 = vunpack.c.l.b16 %v158
    %v563 = vunpack.c.l.b16 %v159
    %v564 = vunpack.c.h.b16 %v159
    %v565 = vunpack.c.l.b16 %v160
    %v566 = vunpack.c.l.b16 %v161
    %v567 = vunpack.c.h.b16 %v161
    %v568 = vunpack.c.l.b16 %v162
    %v569 = vunpack.c.l.b16 %v163
    %v570 = vunpack.c.h.b16 %v163
    %v571 = vunpack.c.l.b16 %v164
    %v572 = vunpack.c.l.b16 %v165
    %v573 = vunpack.c.h.b16 %v165
    %v574 = vunpack.c.l.b16 %v166
    %v575 = vunpack.c.l.b16 %v167
    %v576 = vunpack.c.h.b16 %v167
    %v577 = vunpack.c.l.b16 %v168
    %v578 = vunpack.c.l.b16 %v169
    %v579 = vunpack.c.h.b16 %v169
    %v580 = vunpack.c.l.b16 %v170
    %v581 = vunpack.c.l.b16 %v171
    %v582 = vunpack.c.h.b16 %v171
    %v583 = vunpack.c.l.b16 %v172
    %v584 = vunpack.c.l.b16 %v173
    %v585 = vunpack.c.h.b16 %v173
    %v586 = vunpack.c.l.b16 %v174
    %v587 = vunpack.c.l.b16 %v175
    %v588 = vunpack.c.h.b16 %v175
    %v589 = vunpack.c.l.b16 %v176
    %v590 = vunpack.c.l.b16 %v177
    %v591 = vunpack.c.h.b16 %v177
    %v592 = vunpack.c.l.b16 %v178
    %v593 = vunpack.c.l.b16 %v179
    %v594 = vunpack.c.h.b16 %v179
    %v595 = vunpack.c.l.b16 %v180
    %v596 = vunpack.c.l.b16 %v181
    %v597 = vunpack.c.h.b16 %v181
    %v598 = vunpack.c.l.b16 %v182
    %v599 = vunpack.c.l.b16 %v183
    %v600 = vunpack.c.h.b16 %v183
    %v601 = vunpack.c.l.b16 %v184
    %v602 = vunpack.c.l.b16 %v185
    %v603 = vunpack.c.h.b16 %v185
    %v604 = vunpack.c.l.b16 %v186
    %v605 = vunpack.c.l.b16 %v187
    %v606 = vunpack.c.h.b16 %v187
    %v607 = vunpack.c.l.b16 %v188
    %v608 = vunpack.c.l.b16 %v189
    %v609 = vunpack.c.h.b16 %v189
    %v610 = vunpack.c.l.b16 %v190
    %v611 = vunpack.c.l.b16 %v191
    %v612 = vunpack.c.h.b16 %v191
    %v613 = vunpack.c.l.b16 %v192
    %v614 = vunpack.c.l.b16 %v193
    %v615 = vunpack.c.h.b16 %v193
    %v616 = vunpack.c.l.b16 %v194
    %v617 = vunpack.c.l.b16 %v195
    %v618 = vunpack.c.h.b16 %v195
    %v619 = vunpack.c.l.b16 %v196
    %v620 = vunpack.c.l.b16 %v197
    %v621 = vunpack.c.h.b16 %v197
    %v622 = vunpack.c.l.b16 %v198
    %v623 = vunpack.c.l.b16 %v199
    %v624 = vunpack.c.h.b16 %v199
    %v625 = vunpack.c.l.b16 %v200
    %v626 = vunpack.c.l.b16 %v201
    %v627 = vunpack.c.h.b16 %v201
    %v628 = vunpack.c.l.b16 %v202
    %v629 = vunpack.c.l.b16 %v203
    %v630 = vunpack.c.h.b16 %v203
    %v631 = vunpack.c.l.b16 %v204
    %v632 = vunpack.c.l.b16 %v205
    %v633 = vunpack.c.h.b16 %v205
    %v634 = vunpack.c.l.b16 %v206
    %v635 = vunpack.c.l.b16 %v207
    %v636 = vunpack.c.h.b16 %v207
    %v637 = vunpack.c.l.b16 %v208
    %v638 = vunpack.c.l.b16 %v209
    %v639 = vunpack.c.h.b16 %v209
    %v640 = vunpack.c.l.b16 %v210
    %v641 = vunpack.c.l.b16 %v211
    %v642 = vunpack.c.h.b16 %v211
    %v643 = vunpack.c.l.b16 %v212
    %v644 = vunpack.c.l.b16 %v213
    %v645 = vunpack.c.h.b16 %v213
    %v646 = vunpack.c.l.b16 %v214
    %v647 = vunpack.c.l.b16 %v215
    %v648 = vunpack.c.h.b16 %v215
    %v649 = vunpack.c.l.b16 %v216
    %v650 = vunpack.c.l.b16 %v217
    %v651 = vunpack.c.h.b16 %v217
    %v652 = vunpack.c.l.b16 %v218
    %v653 = vunpack.c.l.b16 %v219
    %v654 = vunpack.c.h.b16 %v219
    %v655 = vunpack.c.l.b16 %v220
    %v656 = vunpack.c.l.b16 %v221
    %v657 = vunpack.c.h.b16 %v221
    %v658 = vunpack.c.l.b16 %v222
    %v659 = vunpack.c.l.b16 %v223
    %v660 = vunpack.c.h.b16 %v223
    %v661 = vunpack.c.l.b16 %v224
    %v662 = vunpack.c.l.b16 %v225
    %v663 = vunpack.c.h.b16 %v225
    %v664 = vunpack.c.l.b16 %v226
    %v665 = vunpack.c.l.b16 %v227
    %v666 = vunpack.c.h.b16 %v227
    %v667 = vunpack.c.l.b16 %v228
    %v668 = vunpack.c.l.b16 %v229
    %v669 = vunpack.c.h.b16 %v229
    %v670 = vunpack.c.l.b16 %v230
    %v671 = vunpack.c.l.b16 %v231
    %v672 = vunpack.c.h.b16 %v231
    %v673 = vunpack.c.l.b16 %v232
    %v674 = vunpack.c.l.b16 %v233
    %v675 = vunpack.c.h.b16 %v233
    %v676 = vunpack.c.l.b16 %v234
    %v677 = vunpack.c.l.b16 %v235
    %v678 = vunpack.c.h.b16 %v235
    %v679 = vunpack.c.l.b16 %v236
    %v680 = vunpack.c.l.b16 %v237
    %v681 = vunpack.c.h.b16 %v237
    %v682 = vunpack.c.l.b16 %v238
    %v683 = vunpack.c.l.b16 %v239
    %v684 = vunpack.c.h.b16 %v239
    %v685 = vunpack.c.l.b16 %v240
    %v686 = vunpack.c.l.b16 %v241
    %v687 = vunpack.c.h.b16 %v241
    %v688 = vunpack.c.l.b16 %v242
    %v689 = vunpack.c.l.b16 %v243
    %v690 = vunpack.c.h.b16 %v243
    %v691 = vunpack.c.l.b16 %v244
    %v692 = vunpack.c.l.b16 %v245
    %v693 = vunpack.c.h.b16 %v245
    %v694 = vunpack.c.l.b16 %v246
    %v695 = vunpack.c.l.b16 %v247
    %v696 = vunpack.c.h.b16 %v247
    %v697 = vunpack.c.l.b16 %v248
    %v698 = vunpack.c.l.b16 %v249
    %v699 = vunpack.c.h.b16 %v249
    %v700 = vunpack.c.l.b16 %v250
    %v701 = vunpack.c.l.b16 %v251
    %v702 = vunpack.c.h.b16 %v251
    %v703 = vunpack.c.l.b16 %v252
    %v704 = vunpack.c.l.b16 %v253
    %v705 = vunpack.c.h.b16 %v253
    %v706 = vunpack.c.l.b16 %v254
    %v707 = vunpack.c.l.b16 %v255
    %v708 = vunpack.c.h.b16 %v255
    %v709 = vunpack.c.l.b16 %v256
    %v710 = vunpack.c.l.b16 %v257
    %v711 = vunpack.c.h.b16 %v257
    %v712 = vunpack.c.l.b16 %v258
    %v713 = vunpack.c.l.b16 %v259
    %v714 = vunpack.c.h.b16 %v259
    %v715 = vunpack.c.l.b16 %v260
    %v716 = vunpack.c.l.b16 %v261
    %v717 = vunpack.c.h.b16 %v261
    %v718 = vunpack.c.l.b16 %v262
    %v719 = vunpack.c.l.b16 %v263
    %v720 = vunpack.c.h.b16 %v263
    %v721 = vunpack.c.l.b16 %v264
    %v722 = vunpack.c.l.b16 %v265
    %v723 = vunpack.c.h.b16 %v265
    %v724 = vunpack.c.l.b16 %v266
    %v725 = vunpack.c.l.b16 %v267
    %v726 = vunpack.c.h.b16 %v267
    %v727 = vunpack.c.l.b16 %v268
    %v728 = vunpack.c.l.b16 %v269
    %v729 = vunpack.c.h.b16 %v269
    %v730 = vunpack.c.l.b16 %v270
    %v731 = vunpack.c.l.b16 %v271
    %v732 = vunpack.c.h.b16 %v271
    %v733 = vunpack.c.l.b16 %v272
    %v734 = vunpack.c.l.b16 %v273
    %v735 = vunpack.c.h.b16 %v273
    %v736 = vunpack.c.l.b16 %v274
    %v737 = vunpack.c.l.b16 %v275
    %v738 = vunpack.c.h.b16 %v275
    %v739 = vunpack.c.l.b16 %v276
    %v740 = vunpack.c.l.b16 %v277
    %v741 = vunpack.c.h.b16 %v277
    %v742 = vunpack.c.l.b16 %v278
    %v743 = vunpack.c.l.b16 %v279
    %v744 = vunpack.c.h.b16 %v279
    %v745 = vunpack.c.l.b16 %v280
    %v746 = vunpack.c.l.b16 %v281
    %v747 = vunpack.c.h.b16 %v281
    %v748 = vunpack.c.l.b16 %v282
    %v749 = vunpack.c.l.b16 %v283
    %v750 = vunpack.c.h.b16 %v283
    %v751 = vunpack.c.l.b16 %v284
    %v752 = vunpack.c.l.b16 %v285
    %v753 = vunpack.c.h.b16 %v285
    %v754 = vunpack.c.l.b16 %v286
    %v755 = vunpack.c.l.b16 %v287
    %v756 = vunpack.c.h.b16 %v287
    %v757 = vunpack.c.l.b16 %v288
    %v758 = vunpack.c.l.b16 %v289
    %v759 = vunpack.c.h.b16 %v289
    %v760 = vunpack.c.l.b16 %v290
    %v761 = vunpack.c.l.b16 %v291
    %v762 = vunpack.c.h.b16 %v291
    %v763 = vunpack.c.l.b16 %v292
    %v764 = vunpack.c.l.b16 %v293
    %v765 = vunpack.c.h.b16 %v293
    %v766 = vunpack.c.l.b16 %v294
    %v767 = vunpack.c.l.b16 %v295
    %v768 = vunpack.c.h.b16 %v295
    %v769 = vunpack.c.l.b16 %v296
    %v770 = vunpack.c.l.b16 %v297
    %v771 = vunpack.c.h.b16 %v297
    %v772 = vunpack.c.l.b16 %v298
    %v773 = vunpack.c.l.b16 %v299
    %v774 = vunpack.c.h.b16 %v299
    %v775 = vunpack.c.l.b16 %v300
    %v776 = vunpack.c.l.b16 %v301
    %v777 = vunpack.c.h.b16 %v301
    %v778 = vunpack.c.l.b16 %v302
    %v779 = vunpack.c.l.b16 %v303
    %v780 = vunpack.c.h.b16 %v303
    %v781 = vunpack.c.l.b16 %v304
    %v782 = vunpack.c.l.b16 %v305
    %v783 = vunpack.c.h.b16 %v305
    %v784 = vunpack.c.l.b16 %v306
    %v785 = vunpack.c.l.b16 %v307
    %v786 = vunpack.c.h.b16 %v307
    %v787 = vunpack.c.l.b16 %v308
    %v788 = vunpack.c.l.b16 %v309
    %v789 = vunpack.c.h.b16 %v309
    %v790 = vunpack.c.l.b16 %v310
    %v791 = vunpack.c.l.b16 %v311
    %v792 = vunpack.c.h.b16 %v311
    %v793 = vunpack.c.l.b16 %v312
    %v794 = vunpack.c.l.b16 %v313
    %v795 = vunpack.c.h.b16 %v313
    %v796 = vunpack.c.l.b16 %v314
    %v797 = vunpack.c.l.b16 %v315
    %v798 = vunpack.c.h.b16 %v315
    %v799 = vunpack.c.l.b16 %v316
    %v800 = vunpack.c.l.b16 %v317
    %v801 = vunpack.c.h.b16 %v317
    %v802 = vunpack.c.l.b16 %v318
    %v803 = vunpack.c.l.b16 %v319
    %v804 = vunpack.c.h.b16 %v319
    %v805 = vunpack.c.l.b16 %v320
    %v806 = vunpack.c.l.b16 %v321
    %v807 = vunpack.c.h.b16 %v321
    %v808 = vunpack.c.l.b16 %v322
    %v809 = vunpack.c.l.b16 %v323
    %v810 = vunpack.c.h.b16 %v323
    %v811 = vunpack.c.l.b16 %v324
    %v812 = vunpack.c.l.b16 %v325
    %v813 = vunpack.c.h.b16 %v325
    %v814 = vunpack.c.l.b16 %v326
    %v815 = vunpack.c.l.b16 %v327
    %v816 = vunpack.c.h.b16 %v327
    %v817 = vunpack.c.l.b16 %v328
    %v818 = vunpack.c.l.b16 %v329
    %v819 = vunpack.c.h.b16 %v329
    %v820 = vunpack.c.l.b16 %v330
    %v821 = vunpack.c.l.b16 %v331
    %v822 = vunpack.c.h.b16 %v331
    %v823 = vunpack.c.l.b16 %v332
    %v824 = vunpack.c.l.b16 %v333
    %v825 = vunpack.c.h.b16 %v333
    %v826 = vunpack.c.l.b16 %v334
    %v827 = vunpack.c.l.b16 %v335
    %v828 = vunpack.c.h.b16 %v335
    %v829 = vunpack.c.l.b16 %v336
    %v830 = vunpack.c.l.b16 %v337
    %v831 = vunpack.c.h.b16 %v337
    %v832 = vunpack.c.l.b16 %v338
    %v833 = vunpack.c.l.b16 %v339
    %v834 = vunpack.c.h.b16 %v339
    %v835 = vunpack.c.l.b16 %v340
    %v836 = vunpack.c.l.b16 %v341
    %v837 = vunpack.c.h.b16 %v341
    %v838 = vunpack.c.l.b16 %v342
    %v839 = vunpack.c.l.b16 %v343
    %v840 = vunpack.c.h.b16 %v343
    %v841 = vunpack.c.l.b16 %v344
    %v842 = vunpack.c.l.b16 %v345
    %v843 = vunpack.c.h.b16 %v345
    %v844 = vunpack.c.l.b16 %v346
    %v845 = vpack.c.b16 %v554, %v551
    %v846 = vpack.c.b16 %v555, %v552
    %v847 = vpack.c.b16 %v556, %v553
    %v848 = vpack.c.b16 %v560, %v557
    %v849 = vpack.c.b16 %v561, %v558
    %v850 = vpack.c.b16 %v562, %v559
    %v851 = vpack.c.b16 %v566, %v563
    %v852 = vpack.c.b16 %v567, %v564
    %v853 = vpack.c.b16 %v568, %v565
    %v854 = vpack.c.b16 %v572, %v569
    %v855 = vpack.c.b16 %v573, %v570
    %v856 = vpack.c.b16 %v574, %v571
    %v857 = vpack.c.b16 %v578, %v575
    %v858 = vpack.c.b16 %v579, %v576
    %v859 = vpack.c.b16 %v580, %v577
    %v860 = vpack.c.b16 %v584, %v581
    %v861 = vpack.c.b16 %v585, %v582
    %v862 = vpack.c.b16 %v586, %v583
    %v863 = vpack.c.b16 %v590, %v587
    %v864 = vpack.c.b16 %v591, %v588
    %v865 = vpack.c.b16 %v592, %v589
    %v866 = vpack.c.b16 %v596, %v593
    %v867 = vpack.c.b16 %v597, %v594
    %v868 = vpack.c.b16 %v598, %v595
    %v869 = vpack.c.b16 %v602, %v599
    %v870 = vpack.c.b16 %v603, %v600
    %v871 = vpack.c.b16 %v604, %v601
    %v872 = vpack.c.b16 %v608, %v605
    %v873 = vpack.c.b16 %v609, %v606
    %v874 = vpack.c.b16 %v610, %v607
    %v875 = vpack.c.b16 %v614, %v611
    %v876 = vpack.c.b16 %v615, %v612
    %v877 = vpack.c.b16 %v616, %v613
    %v878 = vpack.c.b16 %v620, %v617
    %v879 = vpack.c.b16 %v621, %v618
    %v880 = vpack.c.b16 %v622, %v619
    %v881 = vpack.c.b16 %v626, %v623
    %v882 = vpack.c.b16 %v627, %v624
    %v883 = vpack.c.b16 %v628, %v625
    %v884 = vpack.c.b16 %v632, %v629
    %v885 = vpack.c.b16 %v633, %v630
    %v886 = vpack.c.b16 %v634, %v631
    %v887 = vpack.c.b16 %v638, %v635
    %v888 = vpack.c.b16 %v639, %v636
    %v889 = vpack.c.b16 %v640, %v637
    %v890 = vpack.c.b16 %v644, %v641
    %v891 = vpack.c.b16 %v645, %v642
    %v892 = vpack.c.b16 %v646, %v643
    %v893 = vpack.c.b16 %v650, %v647
    %v894 = vpack.c.b16 %v651, %v648
    %v895 = vpack.c.b16 %v652, %v649
    %v896 = vpack.c.b16 %v656, %v653
    %v897 = vpack.c.b16 %v657, %v654
    %v898 = vpack.c.b16 %v658, %v655
    %v899 = vpack.c.b16 %v662, %v659
    %v900 = vpack.c.b16 %v663, %v660
    %v901 = vpack.c.b16 %v664, %v661
    %v902 = vpack.c.b16 %v668, %v665
    %v903 = vpack.c.b16 %v669, %v666
    %v904 = vpack.c.b16 %v670, %v667
    %v905 = vpack.c.b16 %v674, %v671
    %v906 = vpack.c.b16 %v675, %v672
    %v907 = vpack.c.b16 %v676, %v673
    %v908 = vpack.c.b16 %v680, %v677
    %v909 = vpack.c.b16 %v681, %v678
    %v910 = vpack.c.b16 %v682, %v679
    %v911 = vpack.c.b16 %v686, %v683
    %v912 = vpack.c.b16 %v687, %v684
    %v913 = vpack.c.b16 %v688, %v685
    %v914 = vpack.c.b16 %v692, %v689
    %v915 = vpack.c.b16 %v693, %v690
    %v916 = vpack.c.b16 %v694, %v691
    %v917 = vpack.c.b16 %v698, %v695
    %v918 = vpack.c.b16 %v699, %v696
    %v919 = vpack.c.b16 %v700, %v697
    %v920 = vpack.c.b16 %v704, %v701
    %v921 = vpack.c.b16 %v705, %v702
    %v922 = vpack.c.b16 %v706, %v703
    %v923 = vpack.c.b16 %v710, %v707
    %v924 = vpack.c.b16 %v711, %v708
    %v925 = vpack.c.b16 %v712, %v709
    %v926 = vpack.c.b16 %v716, %v713
    %v927 = vpack.c.b16 %v717, %v714
    %v928 = vpack.c.b16 %v718, %v715
    %v929 = vpack.c.b16 %v722, %v719
    %v930 = vpack.c.b16 %v723, %v720
    %v931 = vpack.c.b16 %v724, %v721
    %v932 = vpack.c.b16 %v728, %v725
    %v933 = vpack.c.b16 %v729, %v726
    %v934 = vpack.c.b16 %v730, %v727
    %v935 = vpack.c.b16 %v734, %v731
    %v936 = vpack.c.b16 %v735, %v732
    %v937 = vpack.c.b16 %v736, %v733
    %v938 = vpack.c.b16 %v740, %v737
    %v939 = vpack.c.b16 %v741, %v738
    %v940 = vpack.c.b16 %v742, %v739
    %v941 = vpack.c.b16 %v746, %v743
    %v942 = vpack.c.b16 %v747, %v744
    %v943 = vpack.c.b16 %v748, %v745
    %v944 = vpack.c.b16 %v752, %v749
    %v945 = vpack.c.b16 %v753, %v750
    %v946 = vpack.c.b16 %v754, %v751
    %v947 = vpack.c.b16 %v758, %v755
    %v948 = vpack.c.b16 %v759, %v756
    %v949 = vpack.c.b16 %v760, %v757
    %v950 = vpack.c.b16 %v764, %v761
    %v951 = vpack.c.b16 %v765, %v762
    %v952 = vpack.c.b16 %v766, %v763
    %v953 = vpack.c.b16 %v770, %v767
    %v954 = vpack.c.b16 %v771, %v768
    %v955 = vpack.c.b16 %v772, %v769
    %v956 = vpack.c.b16 %v776, %v773
    %v957 = vpack.c.b16 %v777, %v774
    %v958 = vpack.c.b16 %v778, %v775
    %v959 = vpack.c.b16 %v782, %v779
    %v960 = vpack.c.b16 %v783, %v780
    %v961 = vpack.c.b16 %v784, %v781
    %v962 = vpack.c.b16 %v788, %v785
    %v963 = vpack.c.b16 %v789, %v786
    %v964 = vpack.c.b16 %v790, %v787
    %v965 = vpack.c.b16 %v794, %v791
    %v966 = vpack.c.b16 %v795, %v792
    %v967 = vpack.c.b16 %v796, %v793
    %v968 = vpack.c.b16 %v800, %v797
    %v969 = vpack.c.b16 %v801, %v798
    %v970 = vpack.c.b16 %v802, %v799
    %v971 = vpack.c.b16 %v806, %v803
    %v972 = vpack.c.b16 %v807, %v804
    %v973 = vpack.c.b16 %v808, %v805
    %v974 = vpack.c.b16 %v812, %v809
    %v975 = vpack.c.b16 %v813, %v810
    %v976 = vpack.c.b16 %v814, %v811
    %v977 = vpack.c.b16 %v818, %v815
    %v978 = vpack.c.b16 %v819, %v816
    %v979 = vpack.c.b16 %v820, %v817
    %v980 = vpack.c.b16 %v824, %v821
    %v981 = vpack.c.b16 %v825, %v822
    %v982 = vpack.c.b16 %v826, %v823
    %v983 = vpack.c.b16 %v830, %v827
    %v984 = vpack.c.b16 %v831, %v828
    %v985 = vpack.c.b16 %v832, %v829
    %v986 = vpack.c.b16 %v836, %v833
    %v987 = vpack.c.b16 %v837, %v834
    %v988 = vpack.c.b16 %v838, %v835
    %v989 = vpack.c.b16 %v842, %v839
    %v990 = vpack.c.b16 %v843, %v840
    %v991 = vpack.c.b16 %v844, %v841
    %vm1139 = vcmask 130048
    %v1141 = vsel %vm1139, %v150, 0
    %1143 = vmatpush.bf16.msra.mxu0 %v866
    %1144 = vmatpush.bf16.msra.mxu0 %v863
    %1145 = vmatpush.bf16.msra.mxu0 %v860
    %1146 = vmatpush.bf16.msra.mxu0 %v857
    %1147 = vmatpush.bf16.msra.mxu0 %v854
    %1148 = vmatpush.bf16.msra.mxu0 %v851
    %1149 = vmatpush.bf16.msra.mxu0 %v848
    %1150 = vmatpush.bf16.msra.mxu0 %v845
    %1151 = vmatmul.bf16.gmra.mxu0 %v144
    %v1152 = vpop.f32.mrf.mxu0
    %v1153 = vadd.f32 %v349, %v1152
    %v1154 = vpop.f32.mrf.mxu0
    %1155 = vdwg.mxu0
    %1156 = vmatpush.bf16.msra.mxu0 %v890
    %1157 = vmatpush.bf16.msra.mxu0 %v887
    %1158 = vmatpush.bf16.msra.mxu0 %v884
    %1159 = vmatpush.bf16.msra.mxu0 %v881
    %1160 = vmatpush.bf16.msra.mxu0 %v878
    %1161 = vmatpush.bf16.msra.mxu0 %v875
    %1162 = vmatpush.bf16.msra.mxu0 %v872
    %1163 = vmatpush.bf16.msra.mxu0 %v869
    %1164 = vmatmul.bf16.gmra.mxu0 %v145
    %v1165 = vpop.f32.mrf.mxu0
    %v1166 = vadd.f32 %v1153, %v1165
    %v1167 = vpop.f32.mrf.mxu0
    %1168 = vdwg.mxu0
    %1169 = vmatpush.bf16.msra.mxu0 %v914
    %1170 = vmatpush.bf16.msra.mxu0 %v911
    %1171 = vmatpush.bf16.msra.mxu0 %v908
    %1172 = vmatpush.bf16.msra.mxu0 %v905
    %1173 = vmatpush.bf16.msra.mxu0 %v902
    %1174 = vmatpush.bf16.msra.mxu0 %v899
    %1175 = vmatpush.bf16.msra.mxu0 %v896
    %1176 = vmatpush.bf16.msra.mxu0 %v893
    %1177 = vmatmul.bf16.gmra.mxu0 %v146
    %v1178 = vpop.f32.mrf.mxu0
    %v1179 = vadd.f32 %v1166, %v1178
    %v1180 = vpop.f32.mrf.mxu0
    %1181 = vdwg.mxu0
    %1182 = vmatpush.bf16.msra.mxu0 %v938
    %1183 = vmatpush.bf16.msra.mxu0 %v935
    %1184 = vmatpush.bf16.msra.mxu0 %v932
    %1185 = vmatpush.bf16.msra.mxu0 %v929
    %1186 = vmatpush.bf16.msra.mxu0 %v926
    %1187 = vmatpush.bf16.msra.mxu0 %v923
    %1188 = vmatpush.bf16.msra.mxu0 %v920
    %1189 = vmatpush.bf16.msra.mxu0 %v917
    %1190 = vmatmul.bf16.gmra.mxu0 %v147
    %v1191 = vpop.f32.mrf.mxu0
    %v1192 = vadd.f32 %v1179, %v1191
    %v1193 = vpop.f32.mrf.mxu0
    %1194 = vdwg.mxu0
    %1195 = vmatpush.bf16.msra.mxu0 %v962
    %1196 = vmatpush.bf16.msra.mxu0 %v959
    %1197 = vmatpush.bf16.msra.mxu0 %v956
    %1198 = vmatpush.bf16.msra.mxu0 %v953
    %1199 = vmatpush.bf16.msra.mxu0 %v950
    %1200 = vmatpush.bf16.msra.mxu0 %v947
    %1201 = vmatpush.bf16.msra.mxu0 %v944
    %1202 = vmatpush.bf16.msra.mxu0 %v941
    %1203 = vmatmul.bf16.gmra.mxu0 %v148
    %v1204 = vpop.f32.mrf.mxu0
    %v1205 = vadd.f32 %v1192, %v1204
    %v1206 = vpop.f32.mrf.mxu0
    %1207 = vdwg.mxu0
    %1208 = vmatpush.bf16.msra.mxu0 %v986
    %1209 = vmatpush.bf16.msra.mxu0 %v983
    %1210 = vmatpush.bf16.msra.mxu0 %v980
    %1211 = vmatpush.bf16.msra.mxu0 %v977
    %1212 = vmatpush.bf16.msra.mxu0 %v974
    %1213 = vmatpush.bf16.msra.mxu0 %v971
    %1214 = vmatpush.bf16.msra.mxu0 %v968
    %1215 = vmatpush.bf16.msra.mxu0 %v965
    %1216 = vmatmul.bf16.gmra.mxu0 %v149
    %v1217 = vpop.f32.mrf.mxu0
    %v1218 = vadd.f32 %v1205, %v1217
    %v1219 = vpop.f32.mrf.mxu0
    %1220 = vdwg.mxu0
    %1221 = vmatpush.bf16.msra.mxu0 0
    %1222 = vmatpush.bf16.msra.mxu0 0
    %1223 = vmatpush.bf16.msra.mxu0 0
    %1224 = vmatpush.bf16.msra.mxu0 0
    %1225 = vmatpush.bf16.msra.mxu0 0
    %1226 = vmatpush.bf16.msra.mxu0 0
    %1227 = vmatpush.bf16.msra.mxu0 0
    %1228 = vmatpush.bf16.msra.mxu0 %v989
    %1229 = vmatmul.bf16.gmra.mxu0 %v1141
    %v1230 = vpop.f32.mrf.mxu0
    %v1231 = vadd.f32 %v1218, %v1230
    %v1232 = vpop.f32.mrf.mxu0
    %1233 = vdwg.mxu0
    %1234 = vmatpush.bf16.msra.mxu0 %v867
    %1235 = vmatpush.bf16.msra.mxu0 %v864
    %1236 = vmatpush.bf16.msra.mxu0 %v861
    %1237 = vmatpush.bf16.msra.mxu0 %v858
    %1238 = vmatpush.bf16.msra.mxu0 %v855
    %1239 = vmatpush.bf16.msra.mxu0 %v852
    %1240 = vmatpush.bf16.msra.mxu0 %v849
    %1241 = vmatpush.bf16.msra.mxu0 %v846
    %1242 = vmatmul.bf16.gmra.mxu0 %v144
    %v1243 = vpop.f32.mrf.mxu0
    %v1244 = vadd.f32 %v350, %v1243
    %v1245 = vpop.f32.mrf.mxu0
    %1246 = vdwg.mxu0
    %1247 = vmatpush.bf16.msra.mxu0 %v891
    %1248 = vmatpush.bf16.msra.mxu0 %v888
    %1249 = vmatpush.bf16.msra.mxu0 %v885
    %1250 = vmatpush.bf16.msra.mxu0 %v882
    %1251 = vmatpush.bf16.msra.mxu0 %v879
    %1252 = vmatpush.bf16.msra.mxu0 %v876
    %1253 = vmatpush.bf16.msra.mxu0 %v873
    %1254 = vmatpush.bf16.msra.mxu0 %v870
    %1255 = vmatmul.bf16.gmra.mxu0 %v145
    %v1256 = vpop.f32.mrf.mxu0
    %v1257 = vadd.f32 %v1244, %v1256
    %v1258 = vpop.f32.mrf.mxu0
    %1259 = vdwg.mxu0
    %1260 = vmatpush.bf16.msra.mxu0 %v915
    %1261 = vmatpush.bf16.msra.mxu0 %v912
    %1262 = vmatpush.bf16.msra.mxu0 %v909
    %1263 = vmatpush.bf16.msra.mxu0 %v906
    %1264 = vmatpush.bf16.msra.mxu0 %v903
    %1265 = vmatpush.bf16.msra.mxu0 %v900
    %1266 = vmatpush.bf16.msra.mxu0 %v897
    %1267 = vmatpush.bf16.msra.mxu0 %v894
    %1268 = vmatmul.bf16.gmra.mxu0 %v146
    %v1269 = vpop.f32.mrf.mxu0
    %v1270 = vadd.f32 %v1257, %v1269
    %v1271 = vpop.f32.mrf.mxu0
    %1272 = vdwg.mxu0
    %1273 = vmatpush.bf16.msra.mxu0 %v939
    %1274 = vmatpush.bf16.msra.mxu0 %v936
    %1275 = vmatpush.bf16.msra.mxu0 %v933
    %1276 = vmatpush.bf16.msra.mxu0 %v930
    %1277 = vmatpush.bf16.msra.mxu0 %v927
    %1278 = vmatpush.bf16.msra.mxu0 %v924
    %1279 = vmatpush.bf16.msra.mxu0 %v921
    %1280 = vmatpush.bf16.msra.mxu0 %v918
    %1281 = vmatmul.bf16.gmra.mxu0 %v147
    %v1282 = vpop.f32.mrf.mxu0
    %v1283 = vadd.f32 %v1270, %v1282
    %v1284 = vpop.f32.mrf.mxu0
    %1285 = vdwg.mxu0
    %1286 = vmatpush.bf16.msra.mxu0 %v963
    %1287 = vmatpush.bf16.msra.mxu0 %v960
    %1288 = vmatpush.bf16.msra.mxu0 %v957
    %1289 = vmatpush.bf16.msra.mxu0 %v954
    %1290 = vmatpush.bf16.msra.mxu0 %v951
    %1291 = vmatpush.bf16.msra.mxu0 %v948
    %1292 = vmatpush.bf16.msra.mxu0 %v945
    %1293 = vmatpush.bf16.msra.mxu0 %v942
    %1294 = vmatmul.bf16.gmra.mxu0 %v148
    %v1295 = vpop.f32.mrf.mxu0
    %v1296 = vadd.f32 %v1283, %v1295
    %v1297 = vpop.f32.mrf.mxu0
    %1298 = vdwg.mxu0
    %1299 = vmatpush.bf16.msra.mxu0 %v987
    %1300 = vmatpush.bf16.msra.mxu0 %v984
    %1301 = vmatpush.bf16.msra.mxu0 %v981
    %1302 = vmatpush.bf16.msra.mxu0 %v978
    %1303 = vmatpush.bf16.msra.mxu0 %v975
    %1304 = vmatpush.bf16.msra.mxu0 %v972
    %1305 = vmatpush.bf16.msra.mxu0 %v969
    %1306 = vmatpush.bf16.msra.mxu0 %v966
    %1307 = vmatmul.bf16.gmra.mxu0 %v149
    %v1308 = vpop.f32.mrf.mxu0
    %v1309 = vadd.f32 %v1296, %v1308
    %v1310 = vpop.f32.mrf.mxu0
    %1311 = vdwg.mxu0
    %1312 = vmatpush.bf16.msra.mxu0 0
    %1313 = vmatpush.bf16.msra.mxu0 0
    %1314 = vmatpush.bf16.msra.mxu0 0
    %1315 = vmatpush.bf16.msra.mxu0 0
    %1316 = vmatpush.bf16.msra.mxu0 0
    %1317 = vmatpush.bf16.msra.mxu0 0
    %1318 = vmatpush.bf16.msra.mxu0 0
    %1319 = vmatpush.bf16.msra.mxu0 %v990
    %1320 = vmatmul.bf16.gmra.mxu0 %v1141
    %v1321 = vpop.f32.mrf.mxu0
    %v1322 = vadd.f32 %v1309, %v1321
    %v1323 = vpop.f32.mrf.mxu0
    %1324 = vdwg.mxu0
    %1325 = vmatpush.bf16.msra.mxu0 %v868
    %1326 = vmatpush.bf16.msra.mxu0 %v865
    %1327 = vmatpush.bf16.msra.mxu0 %v862
    %1328 = vmatpush.bf16.msra.mxu0 %v859
    %1329 = vmatpush.bf16.msra.mxu0 %v856
    %1330 = vmatpush.bf16.msra.mxu0 %v853
    %1331 = vmatpush.bf16.msra.mxu0 %v850
    %1332 = vmatpush.bf16.msra.mxu0 %v847
    %1333 = vmatmul.bf16.gmra.mxu0 %v144
    %v1334 = vpop.f32.mrf.mxu0
    %v1335 = vadd.f32 %v351, %v1334
    %v1336 = vpop.f32.mrf.mxu0
    %1337 = vdwg.mxu0
    %1338 = vmatpush.bf16.msra.mxu0 %v892
    %1339 = vmatpush.bf16.msra.mxu0 %v889
    %1340 = vmatpush.bf16.msra.mxu0 %v886
    %1341 = vmatpush.bf16.msra.mxu0 %v883
    %1342 = vmatpush.bf16.msra.mxu0 %v880
    %1343 = vmatpush.bf16.msra.mxu0 %v877
    %1344 = vmatpush.bf16.msra.mxu0 %v874
    %1345 = vmatpush.bf16.msra.mxu0 %v871
    %1346 = vmatmul.bf16.gmra.mxu0 %v145
    %v1347 = vpop.f32.mrf.mxu0
    %v1348 = vadd.f32 %v1335, %v1347
    %v1349 = vpop.f32.mrf.mxu0
    %1350 = vdwg.mxu0
    %1351 = vmatpush.bf16.msra.mxu0 %v916
    %1352 = vmatpush.bf16.msra.mxu0 %v913
    %1353 = vmatpush.bf16.msra.mxu0 %v910
    %1354 = vmatpush.bf16.msra.mxu0 %v907
    %1355 = vmatpush.bf16.msra.mxu0 %v904
    %1356 = vmatpush.bf16.msra.mxu0 %v901
    %1357 = vmatpush.bf16.msra.mxu0 %v898
    %1358 = vmatpush.bf16.msra.mxu0 %v895
    %1359 = vmatmul.bf16.gmra.mxu0 %v146
    %v1360 = vpop.f32.mrf.mxu0
    %v1361 = vadd.f32 %v1348, %v1360
    %v1362 = vpop.f32.mrf.mxu0
    %1363 = vdwg.mxu0
    %1364 = vmatpush.bf16.msra.mxu0 %v940
    %1365 = vmatpush.bf16.msra.mxu0 %v937
    %1366 = vmatpush.bf16.msra.mxu0 %v934
    %1367 = vmatpush.bf16.msra.mxu0 %v931
    %1368 = vmatpush.bf16.msra.mxu0 %v928
    %1369 = vmatpush.bf16.msra.mxu0 %v925
    %1370 = vmatpush.bf16.msra.mxu0 %v922
    %1371 = vmatpush.bf16.msra.mxu0 %v919
    %1372 = vmatmul.bf16.gmra.mxu0 %v147
    %v1373 = vpop.f32.mrf.mxu0
    %v1374 = vadd.f32 %v1361, %v1373
    %v1375 = vpop.f32.mrf.mxu0
    %1376 = vdwg.mxu0
    %1377 = vmatpush.bf16.msra.mxu0 %v964
    %1378 = vmatpush.bf16.msra.mxu0 %v961
    %1379 = vmatpush.bf16.msra.mxu0 %v958
    %1380 = vmatpush.bf16.msra.mxu0 %v955
    %1381 = vmatpush.bf16.msra.mxu0 %v952
    %1382 = vmatpush.bf16.msra.mxu0 %v949
    %1383 = vmatpush.bf16.msra.mxu0 %v946
    %1384 = vmatpush.bf16.msra.mxu0 %v943
    %1385 = vmatmul.bf16.gmra.mxu0 %v148
    %v1386 = vpop.f32.mrf.mxu0
    %v1387 = vadd.f32 %v1374, %v1386
    %v1388 = vpop.f32.mrf.mxu0
    %1389 = vdwg.mxu0
    %1390 = vmatpush.bf16.msra.mxu0 %v988
    %1391 = vmatpush.bf16.msra.mxu0 %v985
    %1392 = vmatpush.bf16.msra.mxu0 %v982
    %1393 = vmatpush.bf16.msra.mxu0 %v979
    %1394 = vmatpush.bf16.msra.mxu0 %v976
    %1395 = vmatpush.bf16.msra.mxu0 %v973
    %1396 = vmatpush.bf16.msra.mxu0 %v970
    %1397 = vmatpush.bf16.msra.mxu0 %v967
    %1398 = vmatmul.bf16.gmra.mxu0 %v149
    %v1399 = vpop.f32.mrf.mxu0
    %v1400 = vadd.f32 %v1387, %v1399
    %v1401 = vpop.f32.mrf.mxu0
    %1402 = vdwg.mxu0
    %1403 = vmatpush.bf16.msra.mxu0 0
    %1404 = vmatpush.bf16.msra.mxu0 0
    %1405 = vmatpush.bf16.msra.mxu0 0
    %1406 = vmatpush.bf16.msra.mxu0 0
    %1407 = vmatpush.bf16.msra.mxu0 0
    %1408 = vmatpush.bf16.msra.mxu0 0
    %1409 = vmatpush.bf16.msra.mxu0 0
    %1410 = vmatpush.bf16.msra.mxu0 %v991
    %1411 = vmatmul.bf16.gmra.mxu0 %v1141
    %v1412 = vpop.f32.mrf.mxu0
    %v1413 = vadd.f32 %v1400, %v1412
    %v1414 = vpop.f32.mrf.mxu0
    %1415 = vdwg.mxu0
    %v1416 = vmax.f32 %v1231, 0.0
    %v1417 = vmax.f32 %v1322, 0.0
    %v1418 = vmax.f32 %v1413, 0.0
    %v1419 = vpack.c.bf16 %v1416, %v1416
    %v1420 = vpack.c.bf16 %v1417, %v1417
    %v1421 = vpack.c.bf16 %v1418, %v1418
    %v1422 = vld [vmem:[#allocation8] sm:$0xff]
    %v1423 = vld [vmem:[#allocation8 + $0x8] sm:$0xf]
    %v1424 = vld [vmem:[#allocation8 + $0xc] sm:$0xff]
    %v1425 = vld [vmem:[#allocation8 + $0x14] sm:$0xf]
    %v1426 = vld [vmem:[#allocation8 + $0x18] sm:$0xff]
    %v1427 = vld [vmem:[#allocation8 + $0x20] sm:$0xf]
    %v1428 = vld [vmem:[#allocation8 + $0x24] sm:$0xff]
    %v1429 = vld [vmem:[#allocation8 + $0x2c] sm:$0xf]
    %v1430 = vld [vmem:[#allocation8 + $0x30] sm:$0xff]
    %v1431 = vld [vmem:[#allocation8 + $0x38] sm:$0xf]
    %v1432 = vld [vmem:[#allocation8 + $0x3c] sm:$0xff]
    %v1433 = vld [vmem:[#allocation8 + $0x44] sm:$0xf]
    %v1434 = vld [vmem:[#allocation8 + $0x48] sm:$0xff]
    %v1435 = vld [vmem:[#allocation8 + $0x50] sm:$0xf]
    %v1436 = vld [vmem:[#allocation8 + $0x54] sm:$0xff]
    %v1437 = vld [vmem:[#allocation8 + $0x5c] sm:$0xf]
    %v1438 = vld [vmem:[#allocation8 + $0x60] sm:$0xff]
    %v1439 = vld [vmem:[#allocation8 + $0x68] sm:$0xf]
    %v1440 = vld [vmem:[#allocation8 + $0x6c] sm:$0xff]
    %v1441 = vld [vmem:[#allocation8 + $0x74] sm:$0xf]
    %v1442 = vld [vmem:[#allocation8 + $0x78] sm:$0xff]
    %v1443 = vld [vmem:[#allocation8 + $0x80] sm:$0xf]
    %v1444 = vld [vmem:[#allocation8 + $0x84] sm:$0xff]
    %v1445 = vld [vmem:[#allocation8 + $0x8c] sm:$0xf]
    %v1446 = vld [vmem:[#allocation8 + $0x90] sm:$0xff]
    %v1447 = vld [vmem:[#allocation8 + $0x98] sm:$0xf]
    %v1448 = vld [vmem:[#allocation8 + $0x9c] sm:$0xff]
    %v1449 = vld [vmem:[#allocation8 + $0xa4] sm:$0xf]
    %v1450 = vld [vmem:[#allocation8 + $0xa8] sm:$0xff]
    %v1451 = vld [vmem:[#allocation8 + $0xb0] sm:$0xf]
    %v1452 = vld [vmem:[#allocation8 + $0xb4] sm:$0xff]
    %v1453 = vld [vmem:[#allocation8 + $0xbc] sm:$0xf]
    %v1454 = vld [vmem:[#allocation8 + $0xc0] sm:$0xff]
    %v1455 = vld [vmem:[#allocation8 + $0xc8] sm:$0xf]
    %v1456 = vld [vmem:[#allocation8 + $0xcc] sm:$0xff]
    %v1457 = vld [vmem:[#allocation8 + $0xd4] sm:$0xf]
    %v1458 = vld [vmem:[#allocation8 + $0xd8] sm:$0xff]
    %v1459 = vld [vmem:[#allocation8 + $0xe0] sm:$0xf]
    %v1460 = vld [vmem:[#allocation8 + $0xe4] sm:$0xff]
    %v1461 = vld [vmem:[#allocation8 + $0xec] sm:$0xf]
    %v1462 = vld [vmem:[#allocation8 + $0xf0] sm:$0xff]
    %v1463 = vld [vmem:[#allocation8 + $0xf8] sm:$0xf]
    %v1464 = vld [vmem:[#allocation8 + $0xfc] sm:$0xff]
    %v1465 = vld [vmem:[#allocation8 + $0x104] sm:$0xf]
    %v1466 = vld [vmem:[#allocation8 + $0x108] sm:$0xff]
    %v1467 = vld [vmem:[#allocation8 + $0x110] sm:$0xf]
    %v1468 = vld [vmem:[#allocation8 + $0x114] sm:$0xff]
    %v1469 = vld [vmem:[#allocation8 + $0x11c] sm:$0xf]
    %v1470 = vld [vmem:[#allocation8 + $0x120] sm:$0xff]
    %v1471 = vld [vmem:[#allocation8 + $0x128] sm:$0xf]
    %v1472 = vld [vmem:[#allocation8 + $0x12c] sm:$0xff]
    %v1473 = vld [vmem:[#allocation8 + $0x134] sm:$0xf]
    %v1474 = vld [vmem:[#allocation8 + $0x138] sm:$0xff]
    %v1475 = vld [vmem:[#allocation8 + $0x140] sm:$0xf]
    %v1476 = vld [vmem:[#allocation8 + $0x144] sm:$0xff]
    %v1477 = vld [vmem:[#allocation8 + $0x14c] sm:$0xf]
    %v1478 = vld [vmem:[#allocation8 + $0x150] sm:$0xff]
    %v1479 = vld [vmem:[#allocation8 + $0x158] sm:$0xf]
    %v1480 = vld [vmem:[#allocation8 + $0x15c] sm:$0xff]
    %v1481 = vld [vmem:[#allocation8 + $0x164] sm:$0xf]
    %v1482 = vld [vmem:[#allocation8 + $0x168] sm:$0xff]
    %v1483 = vld [vmem:[#allocation8 + $0x170] sm:$0xf]
    %v1484 = vld [vmem:[#allocation8 + $0x174] sm:$0xff]
    %v1485 = vld [vmem:[#allocation8 + $0x17c] sm:$0xf]
    %v1486 = vld [vmem:[#allocation8 + $0x180] sm:$0xff]
    %v1487 = vld [vmem:[#allocation8 + $0x188] sm:$0xf]
    %v1488 = vld [vmem:[#allocation8 + $0x18c] sm:$0xff]
    %v1489 = vld [vmem:[#allocation8 + $0x194] sm:$0xf]
    %v1490 = vld [vmem:[#allocation8 + $0x198] sm:$0xff]
    %v1491 = vld [vmem:[#allocation8 + $0x1a0] sm:$0xf]
    %v1492 = vld [vmem:[#allocation8 + $0x1a4] sm:$0xff]
    %v1493 = vld [vmem:[#allocation8 + $0x1ac] sm:$0xf]
    %v1494 = vld [vmem:[#allocation8 + $0x1b0] sm:$0xff]
    %v1495 = vld [vmem:[#allocation8 + $0x1b8] sm:$0xf]
    %v1496 = vld [vmem:[#allocation8 + $0x1bc] sm:$0xff]
    %v1497 = vld [vmem:[#allocation8 + $0x1c4] sm:$0xf]
    %v1498 = vld [vmem:[#allocation8 + $0x1c8] sm:$0xff]
    %v1499 = vld [vmem:[#allocation8 + $0x1d0] sm:$0xf]
    %v1500 = vld [vmem:[#allocation8 + $0x1d4] sm:$0xff]
    %v1501 = vld [vmem:[#allocation8 + $0x1dc] sm:$0xf]
    %v1502 = vld [vmem:[#allocation8 + $0x1e0] sm:$0xff]
    %v1503 = vld [vmem:[#allocation8 + $0x1e8] sm:$0xf]
    %v1504 = vld [vmem:[#allocation8 + $0x1ec] sm:$0xff]
    %v1505 = vld [vmem:[#allocation8 + $0x1f4] sm:$0xf]
    %v1506 = vld [vmem:[#allocation8 + $0x1f8] sm:$0xff]
    %v1507 = vld [vmem:[#allocation8 + $0x200] sm:$0xf]
    %v1508 = vld [vmem:[#allocation8 + $0x204] sm:$0xff]
    %v1509 = vld [vmem:[#allocation8 + $0x20c] sm:$0xf]
    %v1510 = vld [vmem:[#allocation8 + $0x210] sm:$0xff]
    %v1511 = vld [vmem:[#allocation8 + $0x218] sm:$0xf]
    %v1512 = vld [vmem:[#allocation8 + $0x21c] sm:$0xff]
    %v1513 = vld [vmem:[#allocation8 + $0x224] sm:$0xf]
    %v1514 = vld [vmem:[#allocation8 + $0x228] sm:$0xff]
    %v1515 = vld [vmem:[#allocation8 + $0x230] sm:$0xf]
    %v1516 = vld [vmem:[#allocation8 + $0x234] sm:$0xff]
    %v1517 = vld [vmem:[#allocation8 + $0x23c] sm:$0xf]
    %v1518 = vld [vmem:[%s4] sm:$0x7]
    %v1520 = vperm.slane %v1518, 0
    %v1521 = vperm.slane %v1518, 1
    %v1522 = vperm.slane %v1518, 2
    %v1622 = vunpack.c.l.b16 %v1422
    %v1623 = vunpack.c.h.b16 %v1422
    %v1624 = vunpack.c.l.b16 %v1423
    %v1625 = vunpack.c.l.b16 %v1424
    %v1626 = vunpack.c.h.b16 %v1424
    %v1627 = vunpack.c.l.b16 %v1425
    %v1628 = vunpack.c.l.b16 %v1426
    %v1629 = vunpack.c.h.b16 %v1426
    %v1630 = vunpack.c.l.b16 %v1427
    %v1631 = vunpack.c.l.b16 %v1428
    %v1632 = vunpack.c.h.b16 %v1428
    %v1633 = vunpack.c.l.b16 %v1429
    %v1634 = vunpack.c.l.b16 %v1430
    %v1635 = vunpack.c.h.b16 %v1430
    %v1636 = vunpack.c.l.b16 %v1431
    %v1637 = vunpack.c.l.b16 %v1432
    %v1638 = vunpack.c.h.b16 %v1432
    %v1639 = vunpack.c.l.b16 %v1433
    %v1640 = vunpack.c.l.b16 %v1434
    %v1641 = vunpack.c.h.b16 %v1434
    %v1642 = vunpack.c.l.b16 %v1435
    %v1643 = vunpack.c.l.b16 %v1436
    %v1644 = vunpack.c.h.b16 %v1436
    %v1645 = vunpack.c.l.b16 %v1437
    %v1646 = vunpack.c.l.b16 %v1438
    %v1647 = vunpack.c.h.b16 %v1438
    %v1648 = vunpack.c.l.b16 %v1439
    %v1649 = vunpack.c.l.b16 %v1440
    %v1650 = vunpack.c.h.b16 %v1440
    %v1651 = vunpack.c.l.b16 %v1441
    %v1652 = vunpack.c.l.b16 %v1442
    %v1653 = vunpack.c.h.b16 %v1442
    %v1654 = vunpack.c.l.b16 %v1443
    %v1655 = vunpack.c.l.b16 %v1444
    %v1656 = vunpack.c.h.b16 %v1444
    %v1657 = vunpack.c.l.b16 %v1445
    %v1658 = vunpack.c.l.b16 %v1446
    %v1659 = vunpack.c.h.b16 %v1446
    %v1660 = vunpack.c.l.b16 %v1447
    %v1661 = vunpack.c.l.b16 %v1448
    %v1662 = vunpack.c.h.b16 %v1448
    %v1663 = vunpack.c.l.b16 %v1449
    %v1664 = vunpack.c.l.b16 %v1450
    %v1665 = vunpack.c.h.b16 %v1450
    %v1666 = vunpack.c.l.b16 %v1451
    %v1667 = vunpack.c.l.b16 %v1452
    %v1668 = vunpack.c.h.b16 %v1452
    %v1669 = vunpack.c.l.b16 %v1453
    %v1670 = vunpack.c.l.b16 %v1454
    %v1671 = vunpack.c.h.b16 %v1454
    %v1672 = vunpack.c.l.b16 %v1455
    %v1673 = vunpack.c.l.b16 %v1456
    %v1674 = vunpack.c.h.b16 %v1456
    %v1675 = vunpack.c.l.b16 %v1457
    %v1676 = vunpack.c.l.b16 %v1458
    %v1677 = vunpack.c.h.b16 %v1458
    %v1678 = vunpack.c.l.b16 %v1459
    %v1679 = vunpack.c.l.b16 %v1460
    %v1680 = vunpack.c.h.b16 %v1460
    %v1681 = vunpack.c.l.b16 %v1461
    %v1682 = vunpack.c.l.b16 %v1462
    %v1683 = vunpack.c.h.b16 %v1462
    %v1684 = vunpack.c.l.b16 %v1463
    %v1685 = vunpack.c.l.b16 %v1464
    %v1686 = vunpack.c.h.b16 %v1464
    %v1687 = vunpack.c.l.b16 %v1465
    %v1688 = vunpack.c.l.b16 %v1466
    %v1689 = vunpack.c.h.b16 %v1466
    %v1690 = vunpack.c.l.b16 %v1467
    %v1691 = vunpack.c.l.b16 %v1468
    %v1692 = vunpack.c.h.b16 %v1468
    %v1693 = vunpack.c.l.b16 %v1469
    %v1694 = vunpack.c.l.b16 %v1470
    %v1695 = vunpack.c.h.b16 %v1470
    %v1696 = vunpack.c.l.b16 %v1471
    %v1697 = vunpack.c.l.b16 %v1472
    %v1698 = vunpack.c.h.b16 %v1472
    %v1699 = vunpack.c.l.b16 %v1473
    %v1700 = vunpack.c.l.b16 %v1474
    %v1701 = vunpack.c.h.b16 %v1474
    %v1702 = vunpack.c.l.b16 %v1475
    %v1703 = vunpack.c.l.b16 %v1476
    %v1704 = vunpack.c.h.b16 %v1476
    %v1705 = vunpack.c.l.b16 %v1477
    %v1706 = vunpack.c.l.b16 %v1478
    %v1707 = vunpack.c.h.b16 %v1478
    %v1708 = vunpack.c.l.b16 %v1479
    %v1709 = vunpack.c.l.b16 %v1480
    %v1710 = vunpack.c.h.b16 %v1480
    %v1711 = vunpack.c.l.b16 %v1481
    %v1712 = vunpack.c.l.b16 %v1482
    %v1713 = vunpack.c.h.b16 %v1482
    %v1714 = vunpack.c.l.b16 %v1483
    %v1715 = vunpack.c.l.b16 %v1484
    %v1716 = vunpack.c.h.b16 %v1484
    %v1717 = vunpack.c.l.b16 %v1485
    %v1718 = vunpack.c.l.b16 %v1486
    %v1719 = vunpack.c.h.b16 %v1486
    %v1720 = vunpack.c.l.b16 %v1487
    %v1721 = vunpack.c.l.b16 %v1488
    %v1722 = vunpack.c.h.b16 %v1488
    %v1723 = vunpack.c.l.b16 %v1489
    %v1724 = vunpack.c.l.b16 %v1490
    %v1725 = vunpack.c.h.b16 %v1490
    %v1726 = vunpack.c.l.b16 %v1491
    %v1727 = vunpack.c.l.b16 %v1492
    %v1728 = vunpack.c.h.b16 %v1492
    %v1729 = vunpack.c.l.b16 %v1493
    %v1730 = vunpack.c.l.b16 %v1494
    %v1731 = vunpack.c.h.b16 %v1494
    %v1732 = vunpack.c.l.b16 %v1495
    %v1733 = vunpack.c.l.b16 %v1496
    %v1734 = vunpack.c.h.b16 %v1496
    %v1735 = vunpack.c.l.b16 %v1497
    %v1736 = vunpack.c.l.b16 %v1498
    %v1737 = vunpack.c.h.b16 %v1498
    %v1738 = vunpack.c.l.b16 %v1499
    %v1739 = vunpack.c.l.b16 %v1500
    %v1740 = vunpack.c.h.b16 %v1500
    %v1741 = vunpack.c.l.b16 %v1501
    %v1742 = vunpack.c.l.b16 %v1502
    %v1743 = vunpack.c.h.b16 %v1502
    %v1744 = vunpack.c.l.b16 %v1503
    %v1745 = vunpack.c.l.b16 %v1504
    %v1746 = vunpack.c.h.b16 %v1504
    %v1747 = vunpack.c.l.b16 %v1505
    %v1748 = vunpack.c.l.b16 %v1506
    %v1749 = vunpack.c.h.b16 %v1506
    %v1750 = vunpack.c.l.b16 %v1507
    %v1751 = vunpack.c.l.b16 %v1508
    %v1752 = vunpack.c.h.b16 %v1508
    %v1753 = vunpack.c.l.b16 %v1509
    %v1754 = vunpack.c.l.b16 %v1510
    %v1755 = vunpack.c.h.b16 %v1510
    %v1756 = vunpack.c.l.b16 %v1511
    %v1757 = vunpack.c.l.b16 %v1512
    %v1758 = vunpack.c.h.b16 %v1512
    %v1759 = vunpack.c.l.b16 %v1513
    %v1760 = vunpack.c.l.b16 %v1514
    %v1761 = vunpack.c.h.b16 %v1514
    %v1762 = vunpack.c.l.b16 %v1515
    %v1763 = vunpack.c.l.b16 %v1516
    %v1764 = vunpack.c.h.b16 %v1516
    %v1765 = vunpack.c.l.b16 %v1517
    %v1766 = vpack.c.b16 %v1625, %v1622
    %v1767 = vpack.c.b16 %v1626, %v1623
    %v1768 = vpack.c.b16 %v1627, %v1624
    %v1769 = vpack.c.b16 %v1631, %v1628
    %v1770 = vpack.c.b16 %v1632, %v1629
    %v1771 = vpack.c.b16 %v1633, %v1630
    %v1772 = vpack.c.b16 %v1637, %v1634
    %v1773 = vpack.c.b16 %v1638, %v1635
    %v1774 = vpack.c.b16 %v1639, %v1636
    %v1775 = vpack.c.b16 %v1643, %v1640
    %v1776 = vpack.c.b16 %v1644, %v1641
    %v1777 = vpack.c.b16 %v1645, %v1642
    %v1778 = vpack.c.b16 %v1649, %v1646
    %v1779 = vpack.c.b16 %v1650, %v1647
    %v1780 = vpack.c.b16 %v1651, %v1648
    %v1781 = vpack.c.b16 %v1655, %v1652
    %v1782 = vpack.c.b16 %v1656, %v1653
    %v1783 = vpack.c.b16 %v1657, %v1654
    %v1784 = vpack.c.b16 %v1661, %v1658
    %v1785 = vpack.c.b16 %v1662, %v1659
    %v1786 = vpack.c.b16 %v1663, %v1660
    %v1787 = vpack.c.b16 %v1667, %v1664
    %v1788 = vpack.c.b16 %v1668, %v1665
    %v1789 = vpack.c.b16 %v1669, %v1666
    %v1790 = vpack.c.b16 %v1673, %v1670
    %v1791 = vpack.c.b16 %v1674, %v1671
    %v1792 = vpack.c.b16 %v1675, %v1672
    %v1793 = vpack.c.b16 %v1679, %v1676
    %v1794 = vpack.c.b16 %v1680, %v1677
    %v1795 = vpack.c.b16 %v1681, %v1678
    %v1796 = vpack.c.b16 %v1685, %v1682
    %v1797 = vpack.c.b16 %v1686, %v1683
    %v1798 = vpack.c.b16 %v1687, %v1684
    %v1799 = vpack.c.b16 %v1691, %v1688
    %v1800 = vpack.c.b16 %v1692, %v1689
    %v1801 = vpack.c.b16 %v1693, %v1690
    %v1802 = vpack.c.b16 %v1697, %v1694
    %v1803 = vpack.c.b16 %v1698, %v1695
    %v1804 = vpack.c.b16 %v1699, %v1696
    %v1805 = vpack.c.b16 %v1703, %v1700
    %v1806 = vpack.c.b16 %v1704, %v1701
    %v1807 = vpack.c.b16 %v1705, %v1702
    %v1808 = vpack.c.b16 %v1709, %v1706
    %v1809 = vpack.c.b16 %v1710, %v1707
    %v1810 = vpack.c.b16 %v1711, %v1708
    %v1811 = vpack.c.b16 %v1715, %v1712
    %v1812 = vpack.c.b16 %v1716, %v1713
    %v1813 = vpack.c.b16 %v1717, %v1714
    %v1814 = vpack.c.b16 %v1721, %v1718
    %v1815 = vpack.c.b16 %v1722, %v1719
    %v1816 = vpack.c.b16 %v1723, %v1720
    %v1817 = vpack.c.b16 %v1727, %v1724
    %v1818 = vpack.c.b16 %v1728, %v1725
    %v1819 = vpack.c.b16 %v1729, %v1726
    %v1820 = vpack.c.b16 %v1733, %v1730
    %v1821 = vpack.c.b16 %v1734, %v1731
    %v1822 = vpack.c.b16 %v1735, %v1732
    %v1823 = vpack.c.b16 %v1739, %v1736
    %v1824 = vpack.c.b16 %v1740, %v1737
    %v1825 = vpack.c.b16 %v1741, %v1738
    %v1826 = vpack.c.b16 %v1745, %v1742
    %v1827 = vpack.c.b16 %v1746, %v1743
    %v1828 = vpack.c.b16 %v1747, %v1744
    %v1829 = vpack.c.b16 %v1751, %v1748
    %v1830 = vpack.c.b16 %v1752, %v1749
    %v1831 = vpack.c.b16 %v1753, %v1750
    %v1832 = vpack.c.b16 %v1757, %v1754
    %v1833 = vpack.c.b16 %v1758, %v1755
    %v1834 = vpack.c.b16 %v1759, %v1756
    %v1835 = vpack.c.b16 %v1763, %v1760
    %v1836 = vpack.c.b16 %v1764, %v1761
    %v1837 = vpack.c.b16 %v1765, %v1762
    %1910 = vmatpush.bf16.msra.mxu0 %v1787
    %1911 = vmatpush.bf16.msra.mxu0 %v1784
    %1912 = vmatpush.bf16.msra.mxu0 %v1781
    %1913 = vmatpush.bf16.msra.mxu0 %v1778
    %1914 = vmatpush.bf16.msra.mxu0 %v1775
    %1915 = vmatpush.bf16.msra.mxu0 %v1772
    %1916 = vmatpush.bf16.msra.mxu0 %v1769
    %1917 = vmatpush.bf16.msra.mxu0 %v1766
    %1918 = vmatmul.bf16.gmra.mxu0 %v1419
    %v1919 = vpop.f32.mrf.mxu0
    %v1920 = vadd.f32 %v1520, %v1919
    %v1921 = vpop.f32.mrf.mxu0
    %1922 = vdwg.mxu0
    %1923 = vmatpush.bf16.msra.mxu0 %v1811
    %1924 = vmatpush.bf16.msra.mxu0 %v1808
    %1925 = vmatpush.bf16.msra.mxu0 %v1805
    %1926 = vmatpush.bf16.msra.mxu0 %v1802
    %1927 = vmatpush.bf16.msra.mxu0 %v1799
    %1928 = vmatpush.bf16.msra.mxu0 %v1796
    %1929 = vmatpush.bf16.msra.mxu0 %v1793
    %1930 = vmatpush.bf16.msra.mxu0 %v1790
    %1931 = vmatmul.bf16.gmra.mxu0 %v1420
    %v1932 = vpop.f32.mrf.mxu0
    %v1933 = vadd.f32 %v1920, %v1932
    %v1934 = vpop.f32.mrf.mxu0
    %1935 = vdwg.mxu0
    %1936 = vmatpush.bf16.msra.mxu0 %v1835
    %1937 = vmatpush.bf16.msra.mxu0 %v1832
    %1938 = vmatpush.bf16.msra.mxu0 %v1829
    %1939 = vmatpush.bf16.msra.mxu0 %v1826
    %1940 = vmatpush.bf16.msra.mxu0 %v1823
    %1941 = vmatpush.bf16.msra.mxu0 %v1820
    %1942 = vmatpush.bf16.msra.mxu0 %v1817
    %1943 = vmatpush.bf16.msra.mxu0 %v1814
    %1944 = vmatmul.bf16.gmra.mxu0 %v1421
    %v1945 = vpop.f32.mrf.mxu0
    %v1946 = vadd.f32 %v1933, %v1945
    %v1947 = vpop.f32.mrf.mxu0
    %1948 = vdwg.mxu0
    %1949 = vmatpush.bf16.msra.mxu0 %v1788
    %1950 = vmatpush.bf16.msra.mxu0 %v1785
    %1951 = vmatpush.bf16.msra.mxu0 %v1782
    %1952 = vmatpush.bf16.msra.mxu0 %v1779
    %1953 = vmatpush.bf16.msra.mxu0 %v1776
    %1954 = vmatpush.bf16.msra.mxu0 %v1773
    %1955 = vmatpush.bf16.msra.mxu0 %v1770
    %1956 = vmatpush.bf16.msra.mxu0 %v1767
    %1957 = vmatmul.bf16.gmra.mxu0 %v1419
    %v1958 = vpop.f32.mrf.mxu0
    %v1959 = vadd.f32 %v1521, %v1958
    %v1960 = vpop.f32.mrf.mxu0
    %1961 = vdwg.mxu0
    %1962 = vmatpush.bf16.msra.mxu0 %v1812
    %1963 = vmatpush.bf16.msra.mxu0 %v1809
    %1964 = vmatpush.bf16.msra.mxu0 %v1806
    %1965 = vmatpush.bf16.msra.mxu0 %v1803
    %1966 = vmatpush.bf16.msra.mxu0 %v1800
    %1967 = vmatpush.bf16.msra.mxu0 %v1797
    %1968 = vmatpush.bf16.msra.mxu0 %v1794
    %1969 = vmatpush.bf16.msra.mxu0 %v1791
    %1970 = vmatmul.bf16.gmra.mxu0 %v1420
    %v1971 = vpop.f32.mrf.mxu0
    %v1972 = vadd.f32 %v1959, %v1971
    %v1973 = vpop.f32.mrf.mxu0
    %1974 = vdwg.mxu0
    %1975 = vmatpush.bf16.msra.mxu0 %v1836
    %1976 = vmatpush.bf16.msra.mxu0 %v1833
    %1977 = vmatpush.bf16.msra.mxu0 %v1830
    %1978 = vmatpush.bf16.msra.mxu0 %v1827
    %1979 = vmatpush.bf16.msra.mxu0 %v1824
    %1980 = vmatpush.bf16.msra.mxu0 %v1821
    %1981 = vmatpush.bf16.msra.mxu0 %v1818
    %1982 = vmatpush.bf16.msra.mxu0 %v1815
    %1983 = vmatmul.bf16.gmra.mxu0 %v1421
    %v1984 = vpop.f32.mrf.mxu0
    %v1985 = vadd.f32 %v1972, %v1984
    %v1986 = vpop.f32.mrf.mxu0
    %1987 = vdwg.mxu0
    %1988 = vmatpush.bf16.msra.mxu0 %v1789
    %1989 = vmatpush.bf16.msra.mxu0 %v1786
    %1990 = vmatpush.bf16.msra.mxu0 %v1783
    %1991 = vmatpush.bf16.msra.mxu0 %v1780
    %1992 = vmatpush.bf16.msra.mxu0 %v1777
    %1993 = vmatpush.bf16.msra.mxu0 %v1774
    %1994 = vmatpush.bf16.msra.mxu0 %v1771
    %1995 = vmatpush.bf16.msra.mxu0 %v1768
    %1996 = vmatmul.bf16.gmra.mxu0 %v1419
    %v1997 = vpop.f32.mrf.mxu0
    %v1998 = vadd.f32 %v1522, %v1997
    %v1999 = vpop.f32.mrf.mxu0
    %2000 = vdwg.mxu0
    %2001 = vmatpush.bf16.msra.mxu0 %v1813
    %2002 = vmatpush.bf16.msra.mxu0 %v1810
    %2003 = vmatpush.bf16.msra.mxu0 %v1807
    %2004 = vmatpush.bf16.msra.mxu0 %v1804
    %2005 = vmatpush.bf16.msra.mxu0 %v1801
    %2006 = vmatpush.bf16.msra.mxu0 %v1798
    %2007 = vmatpush.bf16.msra.mxu0 %v1795
    %2008 = vmatpush.bf16.msra.mxu0 %v1792
    %2009 = vmatmul.bf16.gmra.mxu0 %v1420
    %v2010 = vpop.f32.mrf.mxu0
    %v2011 = vadd.f32 %v1998, %v2010
    %v2012 = vpop.f32.mrf.mxu0
    %2013 = vdwg.mxu0
    %2014 = vmatpush.bf16.msra.mxu0 %v1837
    %2015 = vmatpush.bf16.msra.mxu0 %v1834
    %2016 = vmatpush.bf16.msra.mxu0 %v1831
    %2017 = vmatpush.bf16.msra.mxu0 %v1828
    %2018 = vmatpush.bf16.msra.mxu0 %v1825
    %2019 = vmatpush.bf16.msra.mxu0 %v1822
    %2020 = vmatpush.bf16.msra.mxu0 %v1819
    %2021 = vmatpush.bf16.msra.mxu0 %v1816
    %2022 = vmatmul.bf16.gmra.mxu0 %v1421
    %v2023 = vpop.f32.mrf.mxu0
    %v2024 = vadd.f32 %v2011, %v2023
    %v2025 = vpop.f32.mrf.mxu0
    %2026 = vdwg.mxu0
    %v2027 = vmax.f32 %v1946, 0.0
    %v2028 = vmax.f32 %v1985, 0.0
    %v2029 = vmax.f32 %v2024, 0.0
    %v2030 = vpack.c.bf16 %v2027, %v2027
    %v2031 = vpack.c.bf16 %v2028, %v2028
    %v2032 = vpack.c.bf16 %v2029, %v2029
    %v2033 = vld [vmem:[#allocation10] sm:$0xff]
    %v2034 = vld [vmem:[#allocation10 + $0x8] sm:$0xf]
    %v2035 = vld [vmem:[#allocation10 + $0xc] sm:$0xff]
    %v2036 = vld [vmem:[#allocation10 + $0x14] sm:$0xf]
    %v2037 = vld [vmem:[#allocation10 + $0x18] sm:$0xff]
    %v2038 = vld [vmem:[#allocation10 + $0x20] sm:$0xf]
    %v2039 = vld [vmem:[#allocation10 + $0x24] sm:$0xff]
    %v2040 = vld [vmem:[#allocation10 + $0x2c] sm:$0xf]
    %v2041 = vld [vmem:[#allocation10 + $0x30] sm:$0xff]
    %v2042 = vld [vmem:[#allocation10 + $0x38] sm:$0xf]
    %v2043 = vld [vmem:[#allocation10 + $0x3c] sm:$0xff]
    %v2044 = vld [vmem:[#allocation10 + $0x44] sm:$0xf]
    %v2045 = vld [vmem:[#allocation10 + $0x48] sm:$0xff]
    %v2046 = vld [vmem:[#allocation10 + $0x50] sm:$0xf]
    %v2047 = vld [vmem:[#allocation10 + $0x54] sm:$0xff]
    %v2048 = vld [vmem:[#allocation10 + $0x5c] sm:$0xf]
    %v2049 = vld [vmem:[#allocation10 + $0x60] sm:$0xff]
    %v2050 = vld [vmem:[#allocation10 + $0x68] sm:$0xf]
    %v2051 = vld [vmem:[#allocation10 + $0x6c] sm:$0xff]
    %v2052 = vld [vmem:[#allocation10 + $0x74] sm:$0xf]
    %v2053 = vld [vmem:[#allocation10 + $0x78] sm:$0xff]
    %v2054 = vld [vmem:[#allocation10 + $0x80] sm:$0xf]
    %v2055 = vld [vmem:[#allocation10 + $0x84] sm:$0xff]
    %v2056 = vld [vmem:[#allocation10 + $0x8c] sm:$0xf]
    %v2057 = vld [vmem:[#allocation10 + $0x90] sm:$0xff]
    %v2058 = vld [vmem:[#allocation10 + $0x98] sm:$0xf]
    %v2059 = vld [vmem:[#allocation10 + $0x9c] sm:$0xff]
    %v2060 = vld [vmem:[#allocation10 + $0xa4] sm:$0xf]
    %v2061 = vld [vmem:[#allocation10 + $0xa8] sm:$0xff]
    %v2062 = vld [vmem:[#allocation10 + $0xb0] sm:$0xf]
    %v2063 = vld [vmem:[#allocation10 + $0xb4] sm:$0xff]
    %v2064 = vld [vmem:[#allocation10 + $0xbc] sm:$0xf]
    %v2065 = vld [vmem:[#allocation10 + $0xc0] sm:$0xff]
    %v2066 = vld [vmem:[#allocation10 + $0xc8] sm:$0xf]
    %v2067 = vld [vmem:[#allocation10 + $0xcc] sm:$0xff]
    %v2068 = vld [vmem:[#allocation10 + $0xd4] sm:$0xf]
    %v2069 = vld [vmem:[#allocation10 + $0xd8] sm:$0xff]
    %v2070 = vld [vmem:[#allocation10 + $0xe0] sm:$0xf]
    %v2071 = vld [vmem:[#allocation10 + $0xe4] sm:$0xff]
    %v2072 = vld [vmem:[#allocation10 + $0xec] sm:$0xf]
    %v2073 = vld [vmem:[#allocation10 + $0xf0] sm:$0xff]
    %v2074 = vld [vmem:[#allocation10 + $0xf8] sm:$0xf]
    %v2075 = vld [vmem:[#allocation10 + $0xfc] sm:$0xff]
    %v2076 = vld [vmem:[#allocation10 + $0x104] sm:$0xf]
    %v2077 = vld [vmem:[#allocation10 + $0x108] sm:$0xff]
    %v2078 = vld [vmem:[#allocation10 + $0x110] sm:$0xf]
    %v2079 = vld [vmem:[#allocation10 + $0x114] sm:$0xff]
    %v2080 = vld [vmem:[#allocation10 + $0x11c] sm:$0xf]
    %v2081 = vld [vmem:[#allocation10 + $0x120] sm:$0xff]
    %v2082 = vld [vmem:[#allocation10 + $0x128] sm:$0xf]
    %v2083 = vld [vmem:[#allocation10 + $0x12c] sm:$0xff]
    %v2084 = vld [vmem:[#allocation10 + $0x134] sm:$0xf]
    %v2085 = vld [vmem:[#allocation10 + $0x138] sm:$0xff]
    %v2086 = vld [vmem:[#allocation10 + $0x140] sm:$0xf]
    %v2087 = vld [vmem:[#allocation10 + $0x144] sm:$0xff]
    %v2088 = vld [vmem:[#allocation10 + $0x14c] sm:$0xf]
    %v2089 = vld [vmem:[#allocation10 + $0x150] sm:$0xff]
    %v2090 = vld [vmem:[#allocation10 + $0x158] sm:$0xf]
    %v2091 = vld [vmem:[#allocation10 + $0x15c] sm:$0xff]
    %v2092 = vld [vmem:[#allocation10 + $0x164] sm:$0xf]
    %v2093 = vld [vmem:[#allocation10 + $0x168] sm:$0xff]
    %v2094 = vld [vmem:[#allocation10 + $0x170] sm:$0xf]
    %v2095 = vld [vmem:[#allocation10 + $0x174] sm:$0xff]
    %v2096 = vld [vmem:[#allocation10 + $0x17c] sm:$0xf]
    %v2097 = vld [vmem:[#allocation10 + $0x180] sm:$0xff]
    %v2098 = vld [vmem:[#allocation10 + $0x188] sm:$0xf]
    %v2099 = vld [vmem:[#allocation10 + $0x18c] sm:$0xff]
    %v2100 = vld [vmem:[#allocation10 + $0x194] sm:$0xf]
    %v2101 = vld [vmem:[#allocation10 + $0x198] sm:$0xff]
    %v2102 = vld [vmem:[#allocation10 + $0x1a0] sm:$0xf]
    %v2103 = vld [vmem:[#allocation10 + $0x1a4] sm:$0xff]
    %v2104 = vld [vmem:[#allocation10 + $0x1ac] sm:$0xf]
    %v2105 = vld [vmem:[#allocation10 + $0x1b0] sm:$0xff]
    %v2106 = vld [vmem:[#allocation10 + $0x1b8] sm:$0xf]
    %v2107 = vld [vmem:[#allocation10 + $0x1bc] sm:$0xff]
    %v2108 = vld [vmem:[#allocation10 + $0x1c4] sm:$0xf]
    %v2109 = vld [vmem:[#allocation10 + $0x1c8] sm:$0xff]
    %v2110 = vld [vmem:[#allocation10 + $0x1d0] sm:$0xf]
    %v2111 = vld [vmem:[#allocation10 + $0x1d4] sm:$0xff]
    %v2112 = vld [vmem:[#allocation10 + $0x1dc] sm:$0xf]
    %v2113 = vld [vmem:[#allocation10 + $0x1e0] sm:$0xff]
    %v2114 = vld [vmem:[#allocation10 + $0x1e8] sm:$0xf]
    %v2115 = vld [vmem:[#allocation10 + $0x1ec] sm:$0xff]
    %v2116 = vld [vmem:[#allocation10 + $0x1f4] sm:$0xf]
    %v2117 = vld [vmem:[#allocation10 + $0x1f8] sm:$0xff]
    %v2118 = vld [vmem:[#allocation10 + $0x200] sm:$0xf]
    %v2119 = vld [vmem:[#allocation10 + $0x204] sm:$0xff]
    %v2120 = vld [vmem:[#allocation10 + $0x20c] sm:$0xf]
    %v2121 = vld [vmem:[#allocation10 + $0x210] sm:$0xff]
    %v2122 = vld [vmem:[#allocation10 + $0x218] sm:$0xf]
    %v2123 = vld [vmem:[#allocation10 + $0x21c] sm:$0xff]
    %v2124 = vld [vmem:[#allocation10 + $0x224] sm:$0xf]
    %v2125 = vld [vmem:[#allocation10 + $0x228] sm:$0xff]
    %v2126 = vld [vmem:[#allocation10 + $0x230] sm:$0xf]
    %v2127 = vld [vmem:[#allocation10 + $0x234] sm:$0xff]
    %v2128 = vld [vmem:[#allocation10 + $0x23c] sm:$0xf]
    %v2129 = vld [vmem:[#allocation11] sm:$0x7]
    %v2131 = vperm.slane %v2129, 0
    %v2132 = vperm.slane %v2129, 1
    %v2133 = vperm.slane %v2129, 2
    %v2233 = vunpack.c.l.b16 %v2033
    %v2234 = vunpack.c.h.b16 %v2033
    %v2235 = vunpack.c.l.b16 %v2034
    %v2236 = vunpack.c.l.b16 %v2035
    %v2237 = vunpack.c.h.b16 %v2035
    %v2238 = vunpack.c.l.b16 %v2036
    %v2239 = vunpack.c.l.b16 %v2037
    %v2240 = vunpack.c.h.b16 %v2037
    %v2241 = vunpack.c.l.b16 %v2038
    %v2242 = vunpack.c.l.b16 %v2039
    %v2243 = vunpack.c.h.b16 %v2039
    %v2244 = vunpack.c.l.b16 %v2040
    %v2245 = vunpack.c.l.b16 %v2041
    %v2246 = vunpack.c.h.b16 %v2041
    %v2247 = vunpack.c.l.b16 %v2042
    %v2248 = vunpack.c.l.b16 %v2043
    %v2249 = vunpack.c.h.b16 %v2043
    %v2250 = vunpack.c.l.b16 %v2044
    %v2251 = vunpack.c.l.b16 %v2045
    %v2252 = vunpack.c.h.b16 %v2045
    %v2253 = vunpack.c.l.b16 %v2046
    %v2254 = vunpack.c.l.b16 %v2047
    %v2255 = vunpack.c.h.b16 %v2047
    %v2256 = vunpack.c.l.b16 %v2048
    %v2257 = vunpack.c.l.b16 %v2049
    %v2258 = vunpack.c.h.b16 %v2049
    %v2259 = vunpack.c.l.b16 %v2050
    %v2260 = vunpack.c.l.b16 %v2051
    %v2261 = vunpack.c.h.b16 %v2051
    %v2262 = vunpack.c.l.b16 %v2052
    %v2263 = vunpack.c.l.b16 %v2053
    %v2264 = vunpack.c.h.b16 %v2053
    %v2265 = vunpack.c.l.b16 %v2054
    %v2266 = vunpack.c.l.b16 %v2055
    %v2267 = vunpack.c.h.b16 %v2055
    %v2268 = vunpack.c.l.b16 %v2056
    %v2269 = vunpack.c.l.b16 %v2057
    %v2270 = vunpack.c.h.b16 %v2057
    %v2271 = vunpack.c.l.b16 %v2058
    %v2272 = vunpack.c.l.b16 %v2059
    %v2273 = vunpack.c.h.b16 %v2059
    %v2274 = vunpack.c.l.b16 %v2060
    %v2275 = vunpack.c.l.b16 %v2061
    %v2276 = vunpack.c.h.b16 %v2061
    %v2277 = vunpack.c.l.b16 %v2062
    %v2278 = vunpack.c.l.b16 %v2063
    %v2279 = vunpack.c.h.b16 %v2063
    %v2280 = vunpack.c.l.b16 %v2064
    %v2281 = vunpack.c.l.b16 %v2065
    %v2282 = vunpack.c.h.b16 %v2065
    %v2283 = vunpack.c.l.b16 %v2066
    %v2284 = vunpack.c.l.b16 %v2067
    %v2285 = vunpack.c.h.b16 %v2067
    %v2286 = vunpack.c.l.b16 %v2068
    %v2287 = vunpack.c.l.b16 %v2069
    %v2288 = vunpack.c.h.b16 %v2069
    %v2289 = vunpack.c.l.b16 %v2070
    %v2290 = vunpack.c.l.b16 %v2071
    %v2291 = vunpack.c.h.b16 %v2071
    %v2292 = vunpack.c.l.b16 %v2072
    %v2293 = vunpack.c.l.b16 %v2073
    %v2294 = vunpack.c.h.b16 %v2073
    %v2295 = vunpack.c.l.b16 %v2074
    %v2296 = vunpack.c.l.b16 %v2075
    %v2297 = vunpack.c.h.b16 %v2075
    %v2298 = vunpack.c.l.b16 %v2076
    %v2299 = vunpack.c.l.b16 %v2077
    %v2300 = vunpack.c.h.b16 %v2077
    %v2301 = vunpack.c.l.b16 %v2078
    %v2302 = vunpack.c.l.b16 %v2079
    %v2303 = vunpack.c.h.b16 %v2079
    %v2304 = vunpack.c.l.b16 %v2080
    %v2305 = vunpack.c.l.b16 %v2081
    %v2306 = vunpack.c.h.b16 %v2081
    %v2307 = vunpack.c.l.b16 %v2082
    %v2308 = vunpack.c.l.b16 %v2083
    %v2309 = vunpack.c.h.b16 %v2083
    %v2310 = vunpack.c.l.b16 %v2084
    %v2311 = vunpack.c.l.b16 %v2085
    %v2312 = vunpack.c.h.b16 %v2085
    %v2313 = vunpack.c.l.b16 %v2086
    %v2314 = vunpack.c.l.b16 %v2087
    %v2315 = vunpack.c.h.b16 %v2087
    %v2316 = vunpack.c.l.b16 %v2088
    %v2317 = vunpack.c.l.b16 %v2089
    %v2318 = vunpack.c.h.b16 %v2089
    %v2319 = vunpack.c.l.b16 %v2090
    %v2320 = vunpack.c.l.b16 %v2091
    %v2321 = vunpack.c.h.b16 %v2091
    %v2322 = vunpack.c.l.b16 %v2092
    %v2323 = vunpack.c.l.b16 %v2093
    %v2324 = vunpack.c.h.b16 %v2093
    %v2325 = vunpack.c.l.b16 %v2094
    %v2326 = vunpack.c.l.b16 %v2095
    %v2327 = vunpack.c.h.b16 %v2095
    %v2328 = vunpack.c.l.b16 %v2096
    %v2329 = vunpack.c.l.b16 %v2097
    %v2330 = vunpack.c.h.b16 %v2097
    %v2331 = vunpack.c.l.b16 %v2098
    %v2332 = vunpack.c.l.b16 %v2099
    %v2333 = vunpack.c.h.b16 %v2099
    %v2334 = vunpack.c.l.b16 %v2100
    %v2335 = vunpack.c.l.b16 %v2101
    %v2336 = vunpack.c.h.b16 %v2101
    %v2337 = vunpack.c.l.b16 %v2102
    %v2338 = vunpack.c.l.b16 %v2103
    %v2339 = vunpack.c.h.b16 %v2103
    %v2340 = vunpack.c.l.b16 %v2104
    %v2341 = vunpack.c.l.b16 %v2105
    %v2342 = vunpack.c.h.b16 %v2105
    %v2343 = vunpack.c.l.b16 %v2106
    %v2344 = vunpack.c.l.b16 %v2107
    %v2345 = vunpack.c.h.b16 %v2107
    %v2346 = vunpack.c.l.b16 %v2108
    %v2347 = vunpack.c.l.b16 %v2109
    %v2348 = vunpack.c.h.b16 %v2109
    %v2349 = vunpack.c.l.b16 %v2110
    %v2350 = vunpack.c.l.b16 %v2111
    %v2351 = vunpack.c.h.b16 %v2111
    %v2352 = vunpack.c.l.b16 %v2112
    %v2353 = vunpack.c.l.b16 %v2113
    %v2354 = vunpack.c.h.b16 %v2113
    %v2355 = vunpack.c.l.b16 %v2114
    %v2356 = vunpack.c.l.b16 %v2115
    %v2357 = vunpack.c.h.b16 %v2115
    %v2358 = vunpack.c.l.b16 %v2116
    %v2359 = vunpack.c.l.b16 %v2117
    %v2360 = vunpack.c.h.b16 %v2117
    %v2361 = vunpack.c.l.b16 %v2118
    %v2362 = vunpack.c.l.b16 %v2119
    %v2363 = vunpack.c.h.b16 %v2119
    %v2364 = vunpack.c.l.b16 %v2120
    %v2365 = vunpack.c.l.b16 %v2121
    %v2366 = vunpack.c.h.b16 %v2121
    %v2367 = vunpack.c.l.b16 %v2122
    %v2368 = vunpack.c.l.b16 %v2123
    %v2369 = vunpack.c.h.b16 %v2123
    %v2370 = vunpack.c.l.b16 %v2124
    %v2371 = vunpack.c.l.b16 %v2125
    %v2372 = vunpack.c.h.b16 %v2125
    %v2373 = vunpack.c.l.b16 %v2126
    %v2374 = vunpack.c.l.b16 %v2127
    %v2375 = vunpack.c.h.b16 %v2127
    %v2376 = vunpack.c.l.b16 %v2128
    %v2377 = vpack.c.b16 %v2236, %v2233
    %v2378 = vpack.c.b16 %v2237, %v2234
    %v2379 = vpack.c.b16 %v2238, %v2235
    %v2380 = vpack.c.b16 %v2242, %v2239
    %v2381 = vpack.c.b16 %v2243, %v2240
    %v2382 = vpack.c.b16 %v2244, %v2241
    %v2383 = vpack.c.b16 %v2248, %v2245
    %v2384 = vpack.c.b16 %v2249, %v2246
    %v2385 = vpack.c.b16 %v2250, %v2247
    %v2386 = vpack.c.b16 %v2254, %v2251
    %v2387 = vpack.c.b16 %v2255, %v2252
    %v2388 = vpack.c.b16 %v2256, %v2253
    %v2389 = vpack.c.b16 %v2260, %v2257
    %v2390 = vpack.c.b16 %v2261, %v2258
    %v2391 = vpack.c.b16 %v2262, %v2259
    %v2392 = vpack.c.b16 %v2266, %v2263
    %v2393 = vpack.c.b16 %v2267, %v2264
    %v2394 = vpack.c.b16 %v2268, %v2265
    %v2395 = vpack.c.b16 %v2272, %v2269
    %v2396 = vpack.c.b16 %v2273, %v2270
    %v2397 = vpack.c.b16 %v2274, %v2271
    %v2398 = vpack.c.b16 %v2278, %v2275
    %v2399 = vpack.c.b16 %v2279, %v2276
    %v2400 = vpack.c.b16 %v2280, %v2277
    %v2401 = vpack.c.b16 %v2284, %v2281
    %v2402 = vpack.c.b16 %v2285, %v2282
    %v2403 = vpack.c.b16 %v2286, %v2283
    %v2404 = vpack.c.b16 %v2290, %v2287
    %v2405 = vpack.c.b16 %v2291, %v2288
    %v2406 = vpack.c.b16 %v2292, %v2289
    %v2407 = vpack.c.b16 %v2296, %v2293
    %v2408 = vpack.c.b16 %v2297, %v2294
    %v2409 = vpack.c.b16 %v2298, %v2295
    %v2410 = vpack.c.b16 %v2302, %v2299
    %v2411 = vpack.c.b16 %v2303, %v2300
    %v2412 = vpack.c.b16 %v2304, %v2301
    %v2413 = vpack.c.b16 %v2308, %v2305
    %v2414 = vpack.c.b16 %v2309, %v2306
    %v2415 = vpack.c.b16 %v2310, %v2307
    %v2416 = vpack.c.b16 %v2314, %v2311
    %v2417 = vpack.c.b16 %v2315, %v2312
    %v2418 = vpack.c.b16 %v2316, %v2313
    %v2419 = vpack.c.b16 %v2320, %v2317
    %v2420 = vpack.c.b16 %v2321, %v2318
    %v2421 = vpack.c.b16 %v2322, %v2319
    %v2422 = vpack.c.b16 %v2326, %v2323
    %v2423 = vpack.c.b16 %v2327, %v2324
    %v2424 = vpack.c.b16 %v2328, %v2325
    %v2425 = vpack.c.b16 %v2332, %v2329
    %v2426 = vpack.c.b16 %v2333, %v2330
    %v2427 = vpack.c.b16 %v2334, %v2331
    %v2428 = vpack.c.b16 %v2338, %v2335
    %v2429 = vpack.c.b16 %v2339, %v2336
    %v2430 = vpack.c.b16 %v2340, %v2337
    %v2431 = vpack.c.b16 %v2344, %v2341
    %v2432 = vpack.c.b16 %v2345, %v2342
    %v2433 = vpack.c.b16 %v2346, %v2343
    %v2434 = vpack.c.b16 %v2350, %v2347
    %v2435 = vpack.c.b16 %v2351, %v2348
    %v2436 = vpack.c.b16 %v2352, %v2349
    %v2437 = vpack.c.b16 %v2356, %v2353
    %v2438 = vpack.c.b16 %v2357, %v2354
    %v2439 = vpack.c.b16 %v2358, %v2355
    %v2440 = vpack.c.b16 %v2362, %v2359
    %v2441 = vpack.c.b16 %v2363, %v2360
    %v2442 = vpack.c.b16 %v2364, %v2361
    %v2443 = vpack.c.b16 %v2368, %v2365
    %v2444 = vpack.c.b16 %v2369, %v2366
    %v2445 = vpack.c.b16 %v2370, %v2367
    %v2446 = vpack.c.b16 %v2374, %v2371
    %v2447 = vpack.c.b16 %v2375, %v2372
    %v2448 = vpack.c.b16 %v2376, %v2373
    %2521 = vmatpush.bf16.msra.mxu0 %v2398
    %2522 = vmatpush.bf16.msra.mxu0 %v2395
    %2523 = vmatpush.bf16.msra.mxu0 %v2392
    %2524 = vmatpush.bf16.msra.mxu0 %v2389
    %2525 = vmatpush.bf16.msra.mxu0 %v2386
    %2526 = vmatpush.bf16.msra.mxu0 %v2383
    %2527 = vmatpush.bf16.msra.mxu0 %v2380
    %2528 = vmatpush.bf16.msra.mxu0 %v2377
    %2529 = vmatmul.bf16.gmra.mxu0 %v2030
    %v2530 = vpop.f32.mrf.mxu0
    %v2531 = vadd.f32 %v2131, %v2530
    %v2532 = vpop.f32.mrf.mxu0
    %2533 = vdwg.mxu0
    %2534 = vmatpush.bf16.msra.mxu0 %v2422
    %2535 = vmatpush.bf16.msra.mxu0 %v2419
    %2536 = vmatpush.bf16.msra.mxu0 %v2416
    %2537 = vmatpush.bf16.msra.mxu0 %v2413
    %2538 = vmatpush.bf16.msra.mxu0 %v2410
    %2539 = vmatpush.bf16.msra.mxu0 %v2407
    %2540 = vmatpush.bf16.msra.mxu0 %v2404
    %2541 = vmatpush.bf16.msra.mxu0 %v2401
    %2542 = vmatmul.bf16.gmra.mxu0 %v2031
    %v2543 = vpop.f32.mrf.mxu0
    %v2544 = vadd.f32 %v2531, %v2543
    %v2545 = vpop.f32.mrf.mxu0
    %2546 = vdwg.mxu0
    %2547 = vmatpush.bf16.msra.mxu0 %v2446
    %2548 = vmatpush.bf16.msra.mxu0 %v2443
    %2549 = vmatpush.bf16.msra.mxu0 %v2440
    %2550 = vmatpush.bf16.msra.mxu0 %v2437
    %2551 = vmatpush.bf16.msra.mxu0 %v2434
    %2552 = vmatpush.bf16.msra.mxu0 %v2431
    %2553 = vmatpush.bf16.msra.mxu0 %v2428
    %2554 = vmatpush.bf16.msra.mxu0 %v2425
    %2555 = vmatmul.bf16.gmra.mxu0 %v2032
    %v2556 = vpop.f32.mrf.mxu0
    %v2557 = vadd.f32 %v2544, %v2556
    %v2558 = vpop.f32.mrf.mxu0
    %2559 = vdwg.mxu0
    %2560 = vmatpush.bf16.msra.mxu0 %v2399
    %2561 = vmatpush.bf16.msra.mxu0 %v2396
    %2562 = vmatpush.bf16.msra.mxu0 %v2393
    %2563 = vmatpush.bf16.msra.mxu0 %v2390
    %2564 = vmatpush.bf16.msra.mxu0 %v2387
    %2565 = vmatpush.bf16.msra.mxu0 %v2384
    %2566 = vmatpush.bf16.msra.mxu0 %v2381
    %2567 = vmatpush.bf16.msra.mxu0 %v2378
    %2568 = vmatmul.bf16.gmra.mxu0 %v2030
    %v2569 = vpop.f32.mrf.mxu0
    %v2570 = vadd.f32 %v2132, %v2569
    %v2571 = vpop.f32.mrf.mxu0
    %2572 = vdwg.mxu0
    %2573 = vmatpush.bf16.msra.mxu0 %v2423
    %2574 = vmatpush.bf16.msra.mxu0 %v2420
    %2575 = vmatpush.bf16.msra.mxu0 %v2417
    %2576 = vmatpush.bf16.msra.mxu0 %v2414
    %2577 = vmatpush.bf16.msra.mxu0 %v2411
    %2578 = vmatpush.bf16.msra.mxu0 %v2408
    %2579 = vmatpush.bf16.msra.mxu0 %v2405
    %2580 = vmatpush.bf16.msra.mxu0 %v2402
    %2581 = vmatmul.bf16.gmra.mxu0 %v2031
    %v2582 = vpop.f32.mrf.mxu0
    %v2583 = vadd.f32 %v2570, %v2582
    %v2584 = vpop.f32.mrf.mxu0
    %2585 = vdwg.mxu0
    %2586 = vmatpush.bf16.msra.mxu0 %v2447
    %2587 = vmatpush.bf16.msra.mxu0 %v2444
    %2588 = vmatpush.bf16.msra.mxu0 %v2441
    %2589 = vmatpush.bf16.msra.mxu0 %v2438
    %2590 = vmatpush.bf16.msra.mxu0 %v2435
    %2591 = vmatpush.bf16.msra.mxu0 %v2432
    %2592 = vmatpush.bf16.msra.mxu0 %v2429
    %2593 = vmatpush.bf16.msra.mxu0 %v2426
    %2594 = vmatmul.bf16.gmra.mxu0 %v2032
    %v2595 = vpop.f32.mrf.mxu0
    %v2596 = vadd.f32 %v2583, %v2595
    %v2597 = vpop.f32.mrf.mxu0
    %2598 = vdwg.mxu0
    %2599 = vmatpush.bf16.msra.mxu0 %v2400
    %2600 = vmatpush.bf16.msra.mxu0 %v2397
    %2601 = vmatpush.bf16.msra.mxu0 %v2394
    %2602 = vmatpush.bf16.msra.mxu0 %v2391
    %2603 = vmatpush.bf16.msra.mxu0 %v2388
    %2604 = vmatpush.bf16.msra.mxu0 %v2385
    %2605 = vmatpush.bf16.msra.mxu0 %v2382
    %2606 = vmatpush.bf16.msra.mxu0 %v2379
    %2607 = vmatmul.bf16.gmra.mxu0 %v2030
    %v2608 = vpop.f32.mrf.mxu0
    %v2609 = vadd.f32 %v2133, %v2608
    %v2610 = vpop.f32.mrf.mxu0
    %2611 = vdwg.mxu0
    %2612 = vmatpush.bf16.msra.mxu0 %v2424
    %2613 = vmatpush.bf16.msra.mxu0 %v2421
    %2614 = vmatpush.bf16.msra.mxu0 %v2418
    %2615 = vmatpush.bf16.msra.mxu0 %v2415
    %2616 = vmatpush.bf16.msra.mxu0 %v2412
    %2617 = vmatpush.bf16.msra.mxu0 %v2409
    %2618 = vmatpush.bf16.msra.mxu0 %v2406
    %2619 = vmatpush.bf16.msra.mxu0 %v2403
    %2620 = vmatmul.bf16.gmra.mxu0 %v2031
    %v2621 = vpop.f32.mrf.mxu0
    %v2622 = vadd.f32 %v2609, %v2621
    %v2623 = vpop.f32.mrf.mxu0
    %2624 = vdwg.mxu0
    %2625 = vmatpush.bf16.msra.mxu0 %v2448
    %2626 = vmatpush.bf16.msra.mxu0 %v2445
    %2627 = vmatpush.bf16.msra.mxu0 %v2442
    %2628 = vmatpush.bf16.msra.mxu0 %v2439
    %2629 = vmatpush.bf16.msra.mxu0 %v2436
    %2630 = vmatpush.bf16.msra.mxu0 %v2433
    %2631 = vmatpush.bf16.msra.mxu0 %v2430
    %2632 = vmatpush.bf16.msra.mxu0 %v2427
    %2633 = vmatmul.bf16.gmra.mxu0 %v2032
    %v2634 = vpop.f32.mrf.mxu0
    %v2635 = vadd.f32 %v2622, %v2634
    %v2636 = vpop.f32.mrf.mxu0
    %2637 = vdwg.mxu0
    %v2638 = vmax.f32 %v2557, 0.0
    %v2639 = vmax.f32 %v2596, 0.0
    %v2640 = vmax.f32 %v2635, 0.0
    %v2641 = vpack.c.bf16 %v2638, %v2638
    %v2642 = vpack.c.bf16 %v2639, %v2639
    %v2643 = vpack.c.bf16 %v2640, %v2640
    %v2644 = vld [vmem:[#allocation13] sm:$0xf]
    %v2645 = vld [vmem:[#allocation13 + $0x4] sm:$0xf]
    %v2646 = vld [vmem:[#allocation13 + $0x8] sm:$0xf]
    %v2647 = vld [vmem:[#allocation13 + $0xc] sm:$0xf]
    %v2648 = vld [vmem:[#allocation13 + $0x10] sm:$0xf]
    %v2649 = vld [vmem:[#allocation13 + $0x14] sm:$0xf]
    %v2650 = vld [vmem:[#allocation13 + $0x18] sm:$0xf]
    %v2651 = vld [vmem:[#allocation13 + $0x1c] sm:$0xf]
    %v2652 = vld [vmem:[#allocation13 + $0x20] sm:$0xf]
    %v2653 = vld [vmem:[#allocation13 + $0x24] sm:$0xf]
    %v2654 = vld [vmem:[#allocation13 + $0x28] sm:$0xf]
    %v2655 = vld [vmem:[#allocation13 + $0x2c] sm:$0xf]
    %v2656 = vld [vmem:[#allocation13 + $0x30] sm:$0xf]
    %v2657 = vld [vmem:[#allocation13 + $0x34] sm:$0xf]
    %v2658 = vld [vmem:[#allocation13 + $0x38] sm:$0xf]
    %v2659 = vld [vmem:[#allocation13 + $0x3c] sm:$0xf]
    %v2660 = vld [vmem:[#allocation13 + $0x40] sm:$0xf]
    %v2661 = vld [vmem:[#allocation13 + $0x44] sm:$0xf]
    %v2662 = vld [vmem:[#allocation13 + $0x48] sm:$0xf]
    %v2663 = vld [vmem:[#allocation13 + $0x4c] sm:$0xf]
    %v2664 = vld [vmem:[#allocation13 + $0x50] sm:$0xf]
    %v2665 = vld [vmem:[#allocation13 + $0x54] sm:$0xf]
    %v2666 = vld [vmem:[#allocation13 + $0x58] sm:$0xf]
    %v2667 = vld [vmem:[#allocation13 + $0x5c] sm:$0xf]
    %v2668 = vld [vmem:[#allocation13 + $0x60] sm:$0xf]
    %v2669 = vld [vmem:[#allocation13 + $0x64] sm:$0xf]
    %v2670 = vld [vmem:[#allocation13 + $0x68] sm:$0xf]
    %v2671 = vld [vmem:[#allocation13 + $0x6c] sm:$0xf]
    %v2672 = vld [vmem:[#allocation13 + $0x70] sm:$0xf]
    %v2673 = vld [vmem:[#allocation13 + $0x74] sm:$0xf]
    %v2674 = vld [vmem:[#allocation13 + $0x78] sm:$0xf]
    %v2675 = vld [vmem:[#allocation13 + $0x7c] sm:$0xf]
    %v2676 = vld [vmem:[#allocation13 + $0x80] sm:$0xf]
    %v2677 = vld [vmem:[#allocation13 + $0x84] sm:$0xf]
    %v2678 = vld [vmem:[#allocation13 + $0x88] sm:$0xf]
    %v2679 = vld [vmem:[#allocation13 + $0x8c] sm:$0xf]
    %v2680 = vld [vmem:[#allocation13 + $0x90] sm:$0xf]
    %v2681 = vld [vmem:[#allocation13 + $0x94] sm:$0xf]
    %v2682 = vld [vmem:[#allocation13 + $0x98] sm:$0xf]
    %v2683 = vld [vmem:[#allocation13 + $0x9c] sm:$0xf]
    %v2684 = vld [vmem:[#allocation13 + $0xa0] sm:$0xf]
    %v2685 = vld [vmem:[#allocation13 + $0xa4] sm:$0xf]
    %v2686 = vld [vmem:[#allocation13 + $0xa8] sm:$0xf]
    %v2687 = vld [vmem:[#allocation13 + $0xac] sm:$0xf]
    %v2688 = vld [vmem:[#allocation13 + $0xb0] sm:$0xf]
    %v2689 = vld [vmem:[#allocation13 + $0xb4] sm:$0xf]
    %v2690 = vld [vmem:[#allocation13 + $0xb8] sm:$0xf]
    %v2691 = vld [vmem:[#allocation13 + $0xbc] sm:$0xf]
    %v2692 = vld [vmem:[%s8] sm:$0x1]
    %v2694 = vperm.slane %v2692, 0
    %v2744 = vunpack.c.l.b16 %v2644
    %v2745 = vunpack.c.l.b16 %v2645
    %v2746 = vunpack.c.l.b16 %v2646
    %v2747 = vunpack.c.l.b16 %v2647
    %v2748 = vunpack.c.l.b16 %v2648
    %v2749 = vunpack.c.l.b16 %v2649
    %v2750 = vunpack.c.l.b16 %v2650
    %v2751 = vunpack.c.l.b16 %v2651
    %v2752 = vunpack.c.l.b16 %v2652
    %v2753 = vunpack.c.l.b16 %v2653
    %v2754 = vunpack.c.l.b16 %v2654
    %v2755 = vunpack.c.l.b16 %v2655
    %v2756 = vunpack.c.l.b16 %v2656
    %v2757 = vunpack.c.l.b16 %v2657
    %v2758 = vunpack.c.l.b16 %v2658
    %v2759 = vunpack.c.l.b16 %v2659
    %v2760 = vunpack.c.l.b16 %v2660
    %v2761 = vunpack.c.l.b16 %v2661
    %v2762 = vunpack.c.l.b16 %v2662
    %v2763 = vunpack.c.l.b16 %v2663
    %v2764 = vunpack.c.l.b16 %v2664
    %v2765 = vunpack.c.l.b16 %v2665
    %v2766 = vunpack.c.l.b16 %v2666
    %v2767 = vunpack.c.l.b16 %v2667
    %v2768 = vunpack.c.l.b16 %v2668
    %v2769 = vunpack.c.l.b16 %v2669
    %v2770 = vunpack.c.l.b16 %v2670
    %v2771 = vunpack.c.l.b16 %v2671
    %v2772 = vunpack.c.l.b16 %v2672
    %v2773 = vunpack.c.l.b16 %v2673
    %v2774 = vunpack.c.l.b16 %v2674
    %v2775 = vunpack.c.l.b16 %v2675
    %v2776 = vunpack.c.l.b16 %v2676
    %v2777 = vunpack.c.l.b16 %v2677
    %v2778 = vunpack.c.l.b16 %v2678
    %v2779 = vunpack.c.l.b16 %v2679
    %v2780 = vunpack.c.l.b16 %v2680
    %v2781 = vunpack.c.l.b16 %v2681
    %v2782 = vunpack.c.l.b16 %v2682
    %v2783 = vunpack.c.l.b16 %v2683
    %v2784 = vunpack.c.l.b16 %v2684
    %v2785 = vunpack.c.l.b16 %v2685
    %v2786 = vunpack.c.l.b16 %v2686
    %v2787 = vunpack.c.l.b16 %v2687
    %v2788 = vunpack.c.l.b16 %v2688
    %v2789 = vunpack.c.l.b16 %v2689
    %v2790 = vunpack.c.l.b16 %v2690
    %v2791 = vunpack.c.l.b16 %v2691
    %v2792 = vpack.c.b16 %v2745, %v2744
    %v2793 = vpack.c.b16 %v2747, %v2746
    %v2794 = vpack.c.b16 %v2749, %v2748
    %v2795 = vpack.c.b16 %v2751, %v2750
    %v2796 = vpack.c.b16 %v2753, %v2752
    %v2797 = vpack.c.b16 %v2755, %v2754
    %v2798 = vpack.c.b16 %v2757, %v2756
    %v2799 = vpack.c.b16 %v2759, %v2758
    %v2800 = vpack.c.b16 %v2761, %v2760
    %v2801 = vpack.c.b16 %v2763, %v2762
    %v2802 = vpack.c.b16 %v2765, %v2764
    %v2803 = vpack.c.b16 %v2767, %v2766
    %v2804 = vpack.c.b16 %v2769, %v2768
    %v2805 = vpack.c.b16 %v2771, %v2770
    %v2806 = vpack.c.b16 %v2773, %v2772
    %v2807 = vpack.c.b16 %v2775, %v2774
    %v2808 = vpack.c.b16 %v2777, %v2776
    %v2809 = vpack.c.b16 %v2779, %v2778
    %v2810 = vpack.c.b16 %v2781, %v2780
    %v2811 = vpack.c.b16 %v2783, %v2782
    %v2812 = vpack.c.b16 %v2785, %v2784
    %v2813 = vpack.c.b16 %v2787, %v2786
    %v2814 = vpack.c.b16 %v2789, %v2788
    %v2815 = vpack.c.b16 %v2791, %v2790
    %2840 = vmatpush.bf16.msra.mxu0 %v2799
    %2841 = vmatpush.bf16.msra.mxu0 %v2798
    %2842 = vmatpush.bf16.msra.mxu0 %v2797
    %2843 = vmatpush.bf16.msra.mxu0 %v2796
    %2844 = vmatpush.bf16.msra.mxu0 %v2795
    %2845 = vmatpush.bf16.msra.mxu0 %v2794
    %2846 = vmatpush.bf16.msra.mxu0 %v2793
    %2847 = vmatpush.bf16.msra.mxu0 %v2792
    %2848 = vmatmul.bf16.gmra.mxu0 %v2641
    %v2849 = vpop.f32.mrf.mxu0
    %v2850 = vadd.f32 %v2694, %v2849
    %v2851 = vpop.f32.mrf.mxu0
    %2852 = vdwg.mxu0
    %2853 = vmatpush.bf16.msra.mxu0 %v2807
    %2854 = vmatpush.bf16.msra.mxu0 %v2806
    %2855 = vmatpush.bf16.msra.mxu0 %v2805
    %2856 = vmatpush.bf16.msra.mxu0 %v2804
    %2857 = vmatpush.bf16.msra.mxu0 %v2803
    %2858 = vmatpush.bf16.msra.mxu0 %v2802
    %2859 = vmatpush.bf16.msra.mxu0 %v2801
    %2860 = vmatpush.bf16.msra.mxu0 %v2800
    %2861 = vmatmul.bf16.gmra.mxu0 %v2642
    %v2862 = vpop.f32.mrf.mxu0
    %v2863 = vadd.f32 %v2850, %v2862
    %v2864 = vpop.f32.mrf.mxu0
    %2865 = vdwg.mxu0
    %2866 = vmatpush.bf16.msra.mxu0 %v2815
    %2867 = vmatpush.bf16.msra.mxu0 %v2814
    %2868 = vmatpush.bf16.msra.mxu0 %v2813
    %2869 = vmatpush.bf16.msra.mxu0 %v2812
    %2870 = vmatpush.bf16.msra.mxu0 %v2811
    %2871 = vmatpush.bf16.msra.mxu0 %v2810
    %2872 = vmatpush.bf16.msra.mxu0 %v2809
    %2873 = vmatpush.bf16.msra.mxu0 %v2808
    %2874 = vmatmul.bf16.gmra.mxu0 %v2643
    %v2875 = vpop.f32.mrf.mxu0
    %v2876 = vadd.f32 %v2863, %v2875
    %v2877 = vpop.f32.mrf.mxu0
    %2878 = vdwg.mxu0
    %2879 = vst [vmem:[#allocation14] sm:$0xff] %v2876
    // Predicated region
    $region66: #{tpu_custom_call.1} parent=1 // pred_check
      _
    $region67: #{tpu_custom_call.1} parent=1 // pred_check_branch
      %2881 = sbr.rel (0) target = $region69
    $region68: #{tpu_custom_call.1} parent=1 // pred_region
      %2883 = vsyncadd [#allocation4], 0
      %s2885 = sshll.u32 [#allocation14], 4
      %s2886 = int_to_ptr.vmem [resolvable:$true] %s2885
      %s2887 = sshll.u32 %s9, 4
      %s2888 = int_to_ptr.hbm [resolvable:$true] %s2887
      %2890 = dma.vmem_to_hbm [thread:$0]  %s2886, 128, %s2888, [#allocation4]
    $region69: #{tpu_custom_call.1} parent=1 // pred_fallthru
      _
    // Predicated region
    $region70: #{tpu_custom_call.1} parent=1 // pred_check
      _
    $region71: #{tpu_custom_call.1} parent=1 // pred_check_branch
      %2892 = sbr.rel (0) target = $region73
    $region72: #{tpu_custom_call.1} parent=1 // pred_region
      %2894 = dma.done [#allocation4], 128
    $region73: #{tpu_custom_call.1} parent=1 // pred_fallthru
      _
    %2895 = vsyncpa [#allocation3], 1
    %2896 = vsyncpa [#allocation6], 1
    %2897 = vsyncpa [#allocation9], 1
    %2898 = vsyncpa [#allocation12], 1
    %2899 = vsyncpa [#allocation4], 1

</llo_original>
